<compile_context>
chip_gen: v5e
topology: v5e:2x2
jax: 0.10.0
libtpu: 0.0.40
codegen_flags: <defaults>
</compile_context>

<pallas_src>
import functools

import jax
import jax.numpy as jnp
from jax import lax
from jax.experimental import pallas as pl
from jax.experimental.pallas import tpu as pltpu

PRELU_ALPHA = 0.2  # the global `xxxx = torch.tensor(0.2)` slope

# Layer sizes from DFNN_Model.__init__
DIMS = (17, 15, 13, 11, 9, 5)


def _prelu(v, alpha=PRELU_ALPHA):
    return jnp.where(v >= 0, v, alpha * v)


def _round_up(n, m):
    return ((n + m - 1) // m) * m


def dfnn_kernel(x_ref,
                w1_ref, b1_ref,
                w2_ref, b2_ref,
                w3_ref, b3_ref,
                w4_ref, b4_ref,
                w5_ref, b5_ref,
                o_ref):
    # x_ref: (17, TILE_B)  -- batch on lanes.
    # w_l:   (out_l, in_l) -- torch Linear layout, so each layer is W @ h.
    # b_l:   (out_l, 1)    -- broadcast along lanes.
    dot = functools.partial(jnp.dot,
                            preferred_element_type=jnp.float32,
                            precision=lax.Precision.HIGHEST)
    h = x_ref[...]
    h = _prelu(dot(w1_ref[...], h) + b1_ref[...])
    h = _prelu(dot(w2_ref[...], h) + b2_ref[...])
    h = _prelu(dot(w3_ref[...], h) + b3_ref[...])
    h = _prelu(dot(w4_ref[...], h) + b4_ref[...])
    out = dot(w5_ref[...], h) + b5_ref[...]
    o_ref[...] = out.astype(o_ref.dtype)


@functools.partial(jax.jit, static_argnames=("tile_b",))
def dfnn_forward(x, params, tile_b=32768):
    """x: (B, 17) float32.  params: list of (W:(out,in), b:(out,1)) pairs.

    Returns (B, out_features) float32 (same semantics as the torch module).
    """
    B = x.shape[0]
    in_features = DIMS[0]
    out_features = DIMS[-1]

    # Single copy pass: present the batch on the lane axis.  No jnp.pad --
    # the ragged last block is handled by Pallas's masked boundary DMAs.
    xt = x.T  # (17, B)

    # Tile choice: as big as the (static) tile_b allows, but
    #   * a multiple of 128 (lane-axis block constraint),
    #   * clamped so the grid has >= 2 steps when B permits (v7x megacore +
    #     DMA/compute overlap),
    #   * if a single tile covers the whole batch, use the exact batch size
    #     (block == full array dim is always legal).
    tile = min(tile_b, _round_up(pl.cdiv(B, 2), 128))
    tile = max(128, (tile // 128) * 128)
    if tile >= B:
        tile = B
    grid = (pl.cdiv(B, tile),)

    flat_inputs = [xt]
    in_specs = [pl.BlockSpec((in_features, tile), lambda i: (0, i))]
    for (w, b) in params:
        flat_inputs.extend([w, b])
        # Weights/biases: whole array, fetched once, VMEM-resident across grid.
        in_specs.append(pl.BlockSpec(w.shape, lambda i: (0, 0)))
        in_specs.append(pl.BlockSpec(b.shape, lambda i: (0, 0)))

    out_spec = pl.BlockSpec((out_features, tile), lambda i: (0, i))

    fn = pl.pallas_call(
        dfnn_kernel,
        out_shape=jax.ShapeDtypeStruct((out_features, B), jnp.float32),
        grid=grid,
        in_specs=in_specs,
        out_specs=out_spec,
        compiler_params=pltpu.CompilerParams(
            dimension_semantics=("parallel",),
            vmem_limit_bytes=48 * 1024 * 1024),
    )
    out_t = fn(*flat_inputs)            # (5, B), lane-dense stores
    return out_t.T                      # back to torch layout (B, 5)


def init_params(key):
    """Deterministic init mimicking nn.Linear (uniform in +/- 1/sqrt(fan_in)).

    W is (out, in) (torch layout), b is (out, 1).
    """
    params = []
    for i in range(len(DIMS) - 1):
        fan_in, fan_out = DIMS[i], DIMS[i + 1]
        key, kw, kb = jax.random.split(key, 3)
        bound = 1.0 / jnp.sqrt(jnp.float32(fan_in))
        w = jax.random.uniform(kw, (fan_out, fan_in), jnp.float32,
                               minval=-bound, maxval=bound)
        b = jax.random.uniform(kb, (fan_out, 1), jnp.float32,
                               minval=-bound, maxval=bound)
        params.append((w, b))
    return params


def reference_forward(x, params):
    """Plain-JAX reference (torch layout: y = x @ W.T + b.T)."""
    h = x
    for i, (w, b) in enumerate(params):
        h = jnp.dot(h, w.T, precision=lax.Precision.HIGHEST) + b.T
        if i < len(params) - 1:
            h = _prelu(h)
    return h


if __name__ == "__main__":
    key = jax.random.PRNGKey(0)
    key, kx = jax.random.split(key)

    # Small but non-trivial batch: the tile clamp gives a 2-step grid with a
    # ragged (masked) last block, exercising batch tiling, the parallel grid
    # and the pipelined DMAs.
    batch = 200
    x = jax.random.normal(kx, (batch, DIMS[0]), dtype=jnp.float32)
    params = init_params(key)

    out = dfnn_forward(x, params)
    out = jax.block_until_ready(out)

    ref = reference_forward(x, params)
    assert out.shape == (batch, DIMS[-1])
    max_err = float(jnp.max(jnp.abs(out - ref)))
    assert max_err < 1e-4, f"mismatch vs reference: max_err={max_err}"

    print("KERNEL_OK")
</pallas_src>

<mosaic_0001>
module attributes {stable_mosaic.version = 11 : i64} {
  func.func @dfnn_kernel(%arg0: i32, %arg1: memref<17x128xf32, #tpu.memory_space<vmem>>, %arg2: memref<15x17xf32, #tpu.memory_space<vmem>>, %arg3: memref<15x1xf32, #tpu.memory_space<vmem>>, %arg4: memref<13x15xf32, #tpu.memory_space<vmem>>, %arg5: memref<13x1xf32, #tpu.memory_space<vmem>>, %arg6: memref<11x13xf32, #tpu.memory_space<vmem>>, %arg7: memref<11x1xf32, #tpu.memory_space<vmem>>, %arg8: memref<9x11xf32, #tpu.memory_space<vmem>>, %arg9: memref<9x1xf32, #tpu.memory_space<vmem>>, %arg10: memref<5x9xf32, #tpu.memory_space<vmem>>, %arg11: memref<5x1xf32, #tpu.memory_space<vmem>>, %arg12: memref<5x128xf32, #tpu.memory_space<vmem>>) attributes {dimension_semantics = [#tpu.dimension_semantics<parallel>], iteration_bounds = array<i64: 2>, scalar_prefetch = 0 : i64, scratch_operands = 0 : i64, tpu.core_type = #tpu.core_type<tc>, window_params = [{transform_indices = @transform_0, window_bounds = array<i64: 17, 128>}, {pipeline_mode = #tpu.pipeline_mode<synchronous>, transform_indices = @transform_1, window_bounds = array<i64: 15, 17>}, {pipeline_mode = #tpu.pipeline_mode<synchronous>, transform_indices = @transform_2, window_bounds = array<i64: 15, 1>}, {pipeline_mode = #tpu.pipeline_mode<synchronous>, transform_indices = @transform_3, window_bounds = array<i64: 13, 15>}, {pipeline_mode = #tpu.pipeline_mode<synchronous>, transform_indices = @transform_4, window_bounds = array<i64: 13, 1>}, {pipeline_mode = #tpu.pipeline_mode<synchronous>, transform_indices = @transform_5, window_bounds = array<i64: 11, 13>}, {pipeline_mode = #tpu.pipeline_mode<synchronous>, transform_indices = @transform_6, window_bounds = array<i64: 11, 1>}, {pipeline_mode = #tpu.pipeline_mode<synchronous>, transform_indices = @transform_7, window_bounds = array<i64: 9, 11>}, {pipeline_mode = #tpu.pipeline_mode<synchronous>, transform_indices = @transform_8, window_bounds = array<i64: 9, 1>}, {pipeline_mode = #tpu.pipeline_mode<synchronous>, transform_indices = @transform_9, window_bounds = array<i64: 5, 9>}, {pipeline_mode = #tpu.pipeline_mode<synchronous>, transform_indices = @transform_10, window_bounds = array<i64: 5, 1>}, {transform_indices = @transform_11, window_bounds = array<i64: 5, 128>}]} {
    %c0 = arith.constant 0 : index
    %c0_0 = arith.constant 0 : index
    %0 = vector.load %arg1[%c0, %c0_0] : memref<17x128xf32, #tpu.memory_space<vmem>>, vector<17x128xf32>
    %c0_1 = arith.constant 0 : index
    %c0_2 = arith.constant 0 : index
    %1 = vector.load %arg2[%c0_1, %c0_2] : memref<15x17xf32, #tpu.memory_space<vmem>>, vector<15x17xf32>
    %cst = arith.constant dense<0.000000e+00> : vector<15x128xf32>
    %2 = tpu.matmul %1, %0, %cst {dimension_numbers = #tpu.dot_dimension_numbers<[1], [0], [0], [1], [0, 0, 1, 1], [], []>, precision = #tpu.contract_precision<fp32>} : vector<15x17xf32>, vector<17x128xf32>, vector<15x128xf32> -> vector<15x128xf32>
    %c0_3 = arith.constant 0 : index
    %c0_4 = arith.constant 0 : index
    %3 = vector.load %arg3[%c0_3, %c0_4] : memref<15x1xf32, #tpu.memory_space<vmem>>, vector<15x1xf32>
    %4 = vector.broadcast %3 : vector<15x1xf32> to vector<15x128xf32>
    %5 = arith.addf %2, %4 : vector<15x128xf32>
    %cst_5 = arith.constant 0.000000e+00 : f32
    %6 = vector.broadcast %cst_5 : f32 to vector<15x128xf32>
    %7 = arith.cmpf oge, %5, %6 : vector<15x128xf32>
    %cst_6 = arith.constant 2.000000e-01 : f32
    %8 = vector.broadcast %cst_6 : f32 to vector<15x128xf32>
    %9 = arith.mulf %8, %5 : vector<15x128xf32>
    %10 = arith.select %7, %5, %9 : vector<15x128xi1>, vector<15x128xf32>
    %c0_7 = arith.constant 0 : index
    %c0_8 = arith.constant 0 : index
    %11 = vector.load %arg4[%c0_7, %c0_8] : memref<13x15xf32, #tpu.memory_space<vmem>>, vector<13x15xf32>
    %cst_9 = arith.constant dense<0.000000e+00> : vector<13x128xf32>
    %12 = tpu.matmul %11, %10, %cst_9 {dimension_numbers = #tpu.dot_dimension_numbers<[1], [0], [0], [1], [0, 0, 1, 1], [], []>, precision = #tpu.contract_precision<fp32>} : vector<13x15xf32>, vector<15x128xf32>, vector<13x128xf32> -> vector<13x128xf32>
    %c0_10 = arith.constant 0 : index
    %c0_11 = arith.constant 0 : index
    %13 = vector.load %arg5[%c0_10, %c0_11] : memref<13x1xf32, #tpu.memory_space<vmem>>, vector<13x1xf32>
    %14 = vector.broadcast %13 : vector<13x1xf32> to vector<13x128xf32>
    %15 = arith.addf %12, %14 : vector<13x128xf32>
    %cst_12 = arith.constant 0.000000e+00 : f32
    %16 = vector.broadcast %cst_12 : f32 to vector<13x128xf32>
    %17 = arith.cmpf oge, %15, %16 : vector<13x128xf32>
    %cst_13 = arith.constant 2.000000e-01 : f32
    %18 = vector.broadcast %cst_13 : f32 to vector<13x128xf32>
    %19 = arith.mulf %18, %15 : vector<13x128xf32>
    %20 = arith.select %17, %15, %19 : vector<13x128xi1>, vector<13x128xf32>
    %c0_14 = arith.constant 0 : index
    %c0_15 = arith.constant 0 : index
    %21 = vector.load %arg6[%c0_14, %c0_15] : memref<11x13xf32, #tpu.memory_space<vmem>>, vector<11x13xf32>
    %cst_16 = arith.constant dense<0.000000e+00> : vector<11x128xf32>
    %22 = tpu.matmul %21, %20, %cst_16 {dimension_numbers = #tpu.dot_dimension_numbers<[1], [0], [0], [1], [0, 0, 1, 1], [], []>, precision = #tpu.contract_precision<fp32>} : vector<11x13xf32>, vector<13x128xf32>, vector<11x128xf32> -> vector<11x128xf32>
    %c0_17 = arith.constant 0 : index
    %c0_18 = arith.constant 0 : index
    %23 = vector.load %arg7[%c0_17, %c0_18] : memref<11x1xf32, #tpu.memory_space<vmem>>, vector<11x1xf32>
    %24 = vector.broadcast %23 : vector<11x1xf32> to vector<11x128xf32>
    %25 = arith.addf %22, %24 : vector<11x128xf32>
    %cst_19 = arith.constant 0.000000e+00 : f32
    %26 = vector.broadcast %cst_19 : f32 to vector<11x128xf32>
    %27 = arith.cmpf oge, %25, %26 : vector<11x128xf32>
    %cst_20 = arith.constant 2.000000e-01 : f32
    %28 = vector.broadcast %cst_20 : f32 to vector<11x128xf32>
    %29 = arith.mulf %28, %25 : vector<11x128xf32>
    %30 = arith.select %27, %25, %29 : vector<11x128xi1>, vector<11x128xf32>
    %c0_21 = arith.constant 0 : index
    %c0_22 = arith.constant 0 : index
    %31 = vector.load %arg8[%c0_21, %c0_22] : memref<9x11xf32, #tpu.memory_space<vmem>>, vector<9x11xf32>
    %cst_23 = arith.constant dense<0.000000e+00> : vector<9x128xf32>
    %32 = tpu.matmul %31, %30, %cst_23 {dimension_numbers = #tpu.dot_dimension_numbers<[1], [0], [0], [1], [0, 0, 1, 1], [], []>, precision = #tpu.contract_precision<fp32>} : vector<9x11xf32>, vector<11x128xf32>, vector<9x128xf32> -> vector<9x128xf32>
    %c0_24 = arith.constant 0 : index
    %c0_25 = arith.constant 0 : index
    %33 = vector.load %arg9[%c0_24, %c0_25] : memref<9x1xf32, #tpu.memory_space<vmem>>, vector<9x1xf32>
    %34 = vector.broadcast %33 : vector<9x1xf32> to vector<9x128xf32>
    %35 = arith.addf %32, %34 : vector<9x128xf32>
    %cst_26 = arith.constant 0.000000e+00 : f32
    %36 = vector.broadcast %cst_26 : f32 to vector<9x128xf32>
    %37 = arith.cmpf oge, %35, %36 : vector<9x128xf32>
    %cst_27 = arith.constant 2.000000e-01 : f32
    %38 = vector.broadcast %cst_27 : f32 to vector<9x128xf32>
    %39 = arith.mulf %38, %35 : vector<9x128xf32>
    %40 = arith.select %37, %35, %39 : vector<9x128xi1>, vector<9x128xf32>
    %c0_28 = arith.constant 0 : index
    %c0_29 = arith.constant 0 : index
    %41 = vector.load %arg10[%c0_28, %c0_29] : memref<5x9xf32, #tpu.memory_space<vmem>>, vector<5x9xf32>
    %cst_30 = arith.constant dense<0.000000e+00> : vector<5x128xf32>
    %42 = tpu.matmul %41, %40, %cst_30 {dimension_numbers = #tpu.dot_dimension_numbers<[1], [0], [0], [1], [0, 0, 1, 1], [], []>, precision = #tpu.contract_precision<fp32>} : vector<5x9xf32>, vector<9x128xf32>, vector<5x128xf32> -> vector<5x128xf32>
    %c0_31 = arith.constant 0 : index
    %c0_32 = arith.constant 0 : index
    %43 = vector.load %arg11[%c0_31, %c0_32] : memref<5x1xf32, #tpu.memory_space<vmem>>, vector<5x1xf32>
    %44 = vector.broadcast %43 : vector<5x1xf32> to vector<5x128xf32>
    %45 = arith.addf %42, %44 : vector<5x128xf32>
    %c0_33 = arith.constant 0 : index
    %c0_34 = arith.constant 0 : index
    %46 = vector.load %arg12[%c0_33, %c0_34] : memref<5x128xf32, #tpu.memory_space<vmem>>, vector<5x128xf32>
    tpu.vector_store %arg12[%c0_33, %c0_34], %45 {strides = array<i32>} : memref<5x128xf32, #tpu.memory_space<vmem>>, vector<5x128xf32>,
    return
  }
  func.func @transform_0(%arg0: i32) -> (i32, i32) {
    %c0_i32 = arith.constant 0 : i32
    %c0_i32_0 = arith.constant 0 : i32
    return %c0_i32, %arg0 : i32, i32
  }
  func.func @transform_1(%arg0: i32) -> (i32, i32) {
    %c0_i32 = arith.constant 0 : i32
    %c0_i32_0 = arith.constant 0 : i32
    %c0_i32_1 = arith.constant 0 : i32
    return %c0_i32, %c0_i32_0 : i32, i32
  }
  func.func @transform_2(%arg0: i32) -> (i32, i32) {
    %c0_i32 = arith.constant 0 : i32
    %c0_i32_0 = arith.constant 0 : i32
    %c0_i32_1 = arith.constant 0 : i32
    return %c0_i32, %c0_i32_0 : i32, i32
  }
  func.func @transform_3(%arg0: i32) -> (i32, i32) {
    %c0_i32 = arith.constant 0 : i32
    %c0_i32_0 = arith.constant 0 : i32
    %c0_i32_1 = arith.constant 0 : i32
    return %c0_i32, %c0_i32_0 : i32, i32
  }
  func.func @transform_4(%arg0: i32) -> (i32, i32) {
    %c0_i32 = arith.constant 0 : i32
    %c0_i32_0 = arith.constant 0 : i32
    %c0_i32_1 = arith.constant 0 : i32
    return %c0_i32, %c0_i32_0 : i32, i32
  }
  func.func @transform_5(%arg0: i32) -> (i32, i32) {
    %c0_i32 = arith.constant 0 : i32
    %c0_i32_0 = arith.constant 0 : i32
    %c0_i32_1 = arith.constant 0 : i32
    return %c0_i32, %c0_i32_0 : i32, i32
  }
  func.func @transform_6(%arg0: i32) -> (i32, i32) {
    %c0_i32 = arith.constant 0 : i32
    %c0_i32_0 = arith.constant 0 : i32
    %c0_i32_1 = arith.constant 0 : i32
    return %c0_i32, %c0_i32_0 : i32, i32
  }
  func.func @transform_7(%arg0: i32) -> (i32, i32) {
    %c0_i32 = arith.constant 0 : i32
    %c0_i32_0 = arith.constant 0 : i32
    %c0_i32_1 = arith.constant 0 : i32
    return %c0_i32, %c0_i32_0 : i32, i32
  }
  func.func @transform_8(%arg0: i32) -> (i32, i32) {
    %c0_i32 = arith.constant 0 : i32
    %c0_i32_0 = arith.constant 0 : i32
    %c0_i32_1 = arith.constant 0 : i32
    return %c0_i32, %c0_i32_0 : i32, i32
  }
  func.func @transform_9(%arg0: i32) -> (i32, i32) {
    %c0_i32 = arith.constant 0 : i32
    %c0_i32_0 = arith.constant 0 : i32
    %c0_i32_1 = arith.constant 0 : i32
    return %c0_i32, %c0_i32_0 : i32, i32
  }
  func.func @transform_10(%arg0: i32) -> (i32, i32) {
    %c0_i32 = arith.constant 0 : i32
    %c0_i32_0 = arith.constant 0 : i32
    %c0_i32_1 = arith.constant 0 : i32
    return %c0_i32, %c0_i32_0 : i32, i32
  }
  func.func @transform_11(%arg0: i32) -> (i32, i32) {
    %c0_i32 = arith.constant 0 : i32
    %c0_i32_0 = arith.constant 0 : i32
    return %c0_i32, %arg0 : i32, i32
  }
}

</mosaic_0001>

<llo_original>
// kernel: dfnn_forward.1
$region0: #{dfnn_forward.1}
  #allocation0 [shape = 'u32[]', space=smem, size = 0x4, offset = 0x4, fixed_abs, tag = 'smem constant byte address 0x4 - core index']
  #allocation1 [shape = 'u32[72,128]{1,0:T(1,128)}', space=vmem, size = 0x9000, scoped, tag = 'internal scratch']
  %s0 = inlined_call_operand.hbm [shape: f32[17,200], index: 0, kind: input, shape index: {}]
  %s1 = inlined_call_operand.vmem [shape: f32[15,17], index: 1, kind: input, shape index: {}]
  %s2 = inlined_call_operand.vmem [shape: f32[15,1], index: 2, kind: input, shape index: {}]
  %s3 = inlined_call_operand.vmem [shape: f32[13,15], index: 3, kind: input, shape index: {}]
  %s4 = inlined_call_operand.vmem [shape: f32[13,1], index: 4, kind: input, shape index: {}]
  %s5 = inlined_call_operand.vmem [shape: f32[11,13], index: 5, kind: input, shape index: {}]
  %s6 = inlined_call_operand.vmem [shape: f32[11,1], index: 6, kind: input, shape index: {}]
  %s7 = inlined_call_operand.vmem [shape: f32[9,11], index: 7, kind: input, shape index: {}]
  %s8 = inlined_call_operand.vmem [shape: f32[9,1], index: 8, kind: input, shape index: {}]
  %s9 = inlined_call_operand.vmem [shape: f32[5,9], index: 9, kind: input, shape index: {}]
  %s10 = inlined_call_operand.vmem [shape: f32[5,1], index: 10, kind: input, shape index: {}]
  %s11 = inlined_call_operand.hbm [shape: f32[5,200], index: 11, kind: output, shape index: {}]
  %s12 = sld [smem:[#allocation0]]
  $region81: #{dfnn_forward.1} parent=0
    _
  %s14 = ssub.s32 1, %s12
  %s15 = scalar_select 0, %s14, %s12
  $region1: #{dfnn_forward.1} parent=0
    #allocation2 [shape = 'u8[24576]{0}', space=vmem, size = 0x6000, scoped, tag = 'input window, operand 0']
    #allocation3 [shape = 's32[2]{0}', space=sflag, size = 0x8, scoped, tag = 'scoped memory for dfnn_forward.1']
    #allocation4 [shape = 's32[2]{0}', space=sflag, size = 0x8, scoped, tag = 'scoped memory for dfnn_forward.1']
    #allocation5 [shape = 'u8[8192]{0}', space=vmem, size = 0x2000, scoped, tag = 'output window, operand 0']
    %16 = vsyncpa [#allocation3], 0
    %s17 = scalar_lea.sflag [#allocation3], 1
    %18 = vsyncpa %s17, 0
    %19 = vsyncpa [#allocation4], 0
    %s20 = scalar_lea.sflag [#allocation4], 1
    %21 = vsyncpa %s20, 0
    loop: start=0, step=1, limit=4
    $region2: #{dfnn_forward.1} parent=1 // loop_pre_header
      _
    $region3: #{dfnn_forward.1} parent=1 // loop_header
      %s23 = sphi 0, %s27
      %p24 = scmp.ge.s32.totalorder %s23, 4
      %s33 = sphi 0, %s35
      %s36 = sphi 0, %s33
      %s37 = sphi 0, %s36
      %s53 = sphi 0, %s37
      %s57 = sphi 0, %s57
      %s59 = sphi 0, %s57
      %s60 = sphi 0, %s59
      %s74 = sphi 0, %s60
      %s78 = sphi 0, %s78
      %s80 = sphi 0, %s78
      %s81 = sphi 0, %s80
      %s95 = sphi 0, %s81
      %s99 = sphi 0, %s99
      %s101 = sphi 0, %s99
      %s102 = sphi 0, %s101
      %s116 = sphi 0, %s102
      %s120 = sphi 0, %s120
      %s122 = sphi 0, %s120
      %s123 = sphi 0, %s122
      %s137 = sphi 0, %s123
      %s141 = sphi 0, %s141
      %s143 = sphi 0, %s141
      %s144 = sphi 0, %s143
      %s158 = sphi 0, %s144
      %s162 = sphi 0, %s162
      %s164 = sphi 0, %s162
      %s165 = sphi 0, %s164
      %s179 = sphi 0, %s165
      %s183 = sphi 0, %s183
      %s185 = sphi 0, %s183
      %s186 = sphi 0, %s185
      %s200 = sphi 0, %s186
      %s204 = sphi 0, %s204
      %s206 = sphi 0, %s204
      %s207 = sphi 0, %s206
      %s221 = sphi 0, %s207
      %s225 = sphi 0, %s225
      %s227 = sphi 0, %s225
      %s228 = sphi 0, %s227
      %s242 = sphi 0, %s228
      %s246 = sphi 0, %s246
      %s248 = sphi 0, %s246
      %s249 = sphi 0, %s248
      %s263 = sphi 0, %s249
      %s269 = sphi 0, %s271
      %s272 = sphi 0, %s269
      %s273 = sphi 0, %s272
      %s289 = sphi 0, %s273
    $region4: #{dfnn_forward.1} parent=1 // loop_header_branch
      %26 = sbr.rel (%p24) target = $region8
    $region5: #{dfnn_forward.1} parent=1 // loop_body
      %s28 = ssub.s32 %s23, 1
      %s29 = ssub.s32 %s23, 2
      %s30 = sadd.s32 %s23, 1
      %s31 = ssub.s32 %s23, %s30
      %p32 = scmp.eq.s32.totalorder %s31, 0
      %s34 = sadd.s32 %s33, 1
      %s35 = scalar_select %p32, %s33, %s34
      %p38 = pneg %p32
      %p39 = scmp.eq.s32.totalorder %s23, 1
      %p40 = por %p38, %p39
      %p41 = scmp.ne.s32.totalorder %s33, %s36
      %p42 = scmp.eq.s32.totalorder %s23, 0
      %p43 = por %p41, %p42
      %p44 = scmp.ne.s32.totalorder %s33, %s36
      %p45 = scmp.eq.s32.totalorder %s28, 1
      %p46 = por %p44, %p45
      %p47 = scmp.ne.s32.totalorder %s36, %s37
      %p48 = scmp.eq.s32.totalorder %s28, 0
      %p49 = por %p47, %p48
      %p50 = scmp.ne.s32.totalorder %s36, %s37
      %p51 = scmp.eq.s32.totalorder %s29, 1
      %p52 = por %p50, %p51
      %p54 = scmp.ne.s32.totalorder %s37, %s53
      %p55 = scmp.eq.s32.totalorder %s29, 0
      %p56 = por %p54, %p55
      %s58 = sadd.s32 %s57, 1
      %p61 = scmp.eq.s32.totalorder %s23, 1
      %p62 = scmp.ne.s32.totalorder %s57, %s59
      %p63 = scmp.eq.s32.totalorder %s23, 0
      %p64 = por %p62, %p63
      %p65 = scmp.ne.s32.totalorder %s57, %s59
      %p66 = scmp.eq.s32.totalorder %s28, 1
      %p67 = por %p65, %p66
      %p68 = scmp.ne.s32.totalorder %s59, %s60
      %p69 = scmp.eq.s32.totalorder %s28, 0
      %p70 = por %p68, %p69
      %p71 = scmp.ne.s32.totalorder %s59, %s60
      %p72 = scmp.eq.s32.totalorder %s29, 1
      %p73 = por %p71, %p72
      %p75 = scmp.ne.s32.totalorder %s60, %s74
      %p76 = scmp.eq.s32.totalorder %s29, 0
      %p77 = por %p75, %p76
      %s79 = sadd.s32 %s78, 1
      %p82 = scmp.eq.s32.totalorder %s23, 1
      %p83 = scmp.ne.s32.totalorder %s78, %s80
      %p84 = scmp.eq.s32.totalorder %s23, 0
      %p85 = por %p83, %p84
      %p86 = scmp.ne.s32.totalorder %s78, %s80
      %p87 = scmp.eq.s32.totalorder %s28, 1
      %p88 = por %p86, %p87
      %p89 = scmp.ne.s32.totalorder %s80, %s81
      %p90 = scmp.eq.s32.totalorder %s28, 0
      %p91 = por %p89, %p90
      %p92 = scmp.ne.s32.totalorder %s80, %s81
      %p93 = scmp.eq.s32.totalorder %s29, 1
      %p94 = por %p92, %p93
      %p96 = scmp.ne.s32.totalorder %s81, %s95
      %p97 = scmp.eq.s32.totalorder %s29, 0
      %p98 = por %p96, %p97
      %s100 = sadd.s32 %s99, 1
      %p103 = scmp.eq.s32.totalorder %s23, 1
      %p104 = scmp.ne.s32.totalorder %s99, %s101
      %p105 = scmp.eq.s32.totalorder %s23, 0
      %p106 = por %p104, %p105
      %p107 = scmp.ne.s32.totalorder %s99, %s101
      %p108 = scmp.eq.s32.totalorder %s28, 1
      %p109 = por %p107, %p108
      %p110 = scmp.ne.s32.totalorder %s101, %s102
      %p111 = scmp.eq.s32.totalorder %s28, 0
      %p112 = por %p110, %p111
      %p113 = scmp.ne.s32.totalorder %s101, %s102
      %p114 = scmp.eq.s32.totalorder %s29, 1
      %p115 = por %p113, %p114
      %p117 = scmp.ne.s32.totalorder %s102, %s116
      %p118 = scmp.eq.s32.totalorder %s29, 0
      %p119 = por %p117, %p118
      %s121 = sadd.s32 %s120, 1
      %p124 = scmp.eq.s32.totalorder %s23, 1
      %p125 = scmp.ne.s32.totalorder %s120, %s122
      %p126 = scmp.eq.s32.totalorder %s23, 0
      %p127 = por %p125, %p126
      %p128 = scmp.ne.s32.totalorder %s120, %s122
      %p129 = scmp.eq.s32.totalorder %s28, 1
      %p130 = por %p128, %p129
      %p131 = scmp.ne.s32.totalorder %s122, %s123
      %p132 = scmp.eq.s32.totalorder %s28, 0
      %p133 = por %p131, %p132
      %p134 = scmp.ne.s32.totalorder %s122, %s123
      %p135 = scmp.eq.s32.totalorder %s29, 1
      %p136 = por %p134, %p135
      %p138 = scmp.ne.s32.totalorder %s123, %s137
      %p139 = scmp.eq.s32.totalorder %s29, 0
      %p140 = por %p138, %p139
      %s142 = sadd.s32 %s141, 1
      %p145 = scmp.eq.s32.totalorder %s23, 1
      %p146 = scmp.ne.s32.totalorder %s141, %s143
      %p147 = scmp.eq.s32.totalorder %s23, 0
      %p148 = por %p146, %p147
      %p149 = scmp.ne.s32.totalorder %s141, %s143
      %p150 = scmp.eq.s32.totalorder %s28, 1
      %p151 = por %p149, %p150
      %p152 = scmp.ne.s32.totalorder %s143, %s144
      %p153 = scmp.eq.s32.totalorder %s28, 0
      %p154 = por %p152, %p153
      %p155 = scmp.ne.s32.totalorder %s143, %s144
      %p156 = scmp.eq.s32.totalorder %s29, 1
      %p157 = por %p155, %p156
      %p159 = scmp.ne.s32.totalorder %s144, %s158
      %p160 = scmp.eq.s32.totalorder %s29, 0
      %p161 = por %p159, %p160
      %s163 = sadd.s32 %s162, 1
      %p166 = scmp.eq.s32.totalorder %s23, 1
      %p167 = scmp.ne.s32.totalorder %s162, %s164
      %p168 = scmp.eq.s32.totalorder %s23, 0
      %p169 = por %p167, %p168
      %p170 = scmp.ne.s32.totalorder %s162, %s164
      %p171 = scmp.eq.s32.totalorder %s28, 1
      %p172 = por %p170, %p171
      %p173 = scmp.ne.s32.totalorder %s164, %s165
      %p174 = scmp.eq.s32.totalorder %s28, 0
      %p175 = por %p173, %p174
      %p176 = scmp.ne.s32.totalorder %s164, %s165
      %p177 = scmp.eq.s32.totalorder %s29, 1
      %p178 = por %p176, %p177
      %p180 = scmp.ne.s32.totalorder %s165, %s179
      %p181 = scmp.eq.s32.totalorder %s29, 0
      %p182 = por %p180, %p181
      %s184 = sadd.s32 %s183, 1
      %p187 = scmp.eq.s32.totalorder %s23, 1
      %p188 = scmp.ne.s32.totalorder %s183, %s185
      %p189 = scmp.eq.s32.totalorder %s23, 0
      %p190 = por %p188, %p189
      %p191 = scmp.ne.s32.totalorder %s183, %s185
      %p192 = scmp.eq.s32.totalorder %s28, 1
      %p193 = por %p191, %p192
      %p194 = scmp.ne.s32.totalorder %s185, %s186
      %p195 = scmp.eq.s32.totalorder %s28, 0
      %p196 = por %p194, %p195
      %p197 = scmp.ne.s32.totalorder %s185, %s186
      %p198 = scmp.eq.s32.totalorder %s29, 1
      %p199 = por %p197, %p198
      %p201 = scmp.ne.s32.totalorder %s186, %s200
      %p202 = scmp.eq.s32.totalorder %s29, 0
      %p203 = por %p201, %p202
      %s205 = sadd.s32 %s204, 1
      %p208 = scmp.eq.s32.totalorder %s23, 1
      %p209 = scmp.ne.s32.totalorder %s204, %s206
      %p210 = scmp.eq.s32.totalorder %s23, 0
      %p211 = por %p209, %p210
      %p212 = scmp.ne.s32.totalorder %s204, %s206
      %p213 = scmp.eq.s32.totalorder %s28, 1
      %p214 = por %p212, %p213
      %p215 = scmp.ne.s32.totalorder %s206, %s207
      %p216 = scmp.eq.s32.totalorder %s28, 0
      %p217 = por %p215, %p216
      %p218 = scmp.ne.s32.totalorder %s206, %s207
      %p219 = scmp.eq.s32.totalorder %s29, 1
      %p220 = por %p218, %p219
      %p222 = scmp.ne.s32.totalorder %s207, %s221
      %p223 = scmp.eq.s32.totalorder %s29, 0
      %p224 = por %p222, %p223
      %s226 = sadd.s32 %s225, 1
      %p229 = scmp.eq.s32.totalorder %s23, 1
      %p230 = scmp.ne.s32.totalorder %s225, %s227
      %p231 = scmp.eq.s32.totalorder %s23, 0
      %p232 = por %p230, %p231
      %p233 = scmp.ne.s32.totalorder %s225, %s227
      %p234 = scmp.eq.s32.totalorder %s28, 1
      %p235 = por %p233, %p234
      %p236 = scmp.ne.s32.totalorder %s227, %s228
      %p237 = scmp.eq.s32.totalorder %s28, 0
      %p238 = por %p236, %p237
      %p239 = scmp.ne.s32.totalorder %s227, %s228
      %p240 = scmp.eq.s32.totalorder %s29, 1
      %p241 = por %p239, %p240
      %p243 = scmp.ne.s32.totalorder %s228, %s242
      %p244 = scmp.eq.s32.totalorder %s29, 0
      %p245 = por %p243, %p244
      %s247 = sadd.s32 %s246, 1
      %p250 = scmp.eq.s32.totalorder %s23, 1
      %p251 = scmp.ne.s32.totalorder %s246, %s248
      %p252 = scmp.eq.s32.totalorder %s23, 0
      %p253 = por %p251, %p252
      %p254 = scmp.ne.s32.totalorder %s246, %s248
      %p255 = scmp.eq.s32.totalorder %s28, 1
      %p256 = por %p254, %p255
      %p257 = scmp.ne.s32.totalorder %s248, %s249
      %p258 = scmp.eq.s32.totalorder %s28, 0
      %p259 = por %p257, %p258
      %p260 = scmp.ne.s32.totalorder %s248, %s249
      %p261 = scmp.eq.s32.totalorder %s29, 1
      %p262 = por %p260, %p261
      %p264 = scmp.ne.s32.totalorder %s249, %s263
      %p265 = scmp.eq.s32.totalorder %s29, 0
      %p266 = por %p264, %p265
      %s267 = ssub.s32 %s23, %s30
      %p268 = scmp.eq.s32.totalorder %s267, 0
      %s270 = sadd.s32 %s269, 1
      %s271 = scalar_select %p268, %s269, %s270
      %p274 = pneg %p268
      %p275 = scmp.eq.s32.totalorder %s23, 1
      %p276 = por %p274, %p275
      %p277 = scmp.ne.s32.totalorder %s269, %s272
      %p278 = scmp.eq.s32.totalorder %s23, 0
      %p279 = por %p277, %p278
      %p280 = scmp.ne.s32.totalorder %s269, %s272
      %p281 = scmp.eq.s32.totalorder %s28, 1
      %p282 = por %p280, %p281
      %p283 = scmp.ne.s32.totalorder %s272, %s273
      %p284 = scmp.eq.s32.totalorder %s28, 0
      %p285 = por %p283, %p284
      %p286 = scmp.ne.s32.totalorder %s272, %s273
      %p287 = scmp.eq.s32.totalorder %s29, 1
      %p288 = por %p286, %p287
      %p290 = scmp.ne.s32.totalorder %s273, %s289
      %p291 = scmp.eq.s32.totalorder %s29, 0
      %p292 = por %p290, %p291
      %p293 = scmp.le.s32.totalorder 1, %s23
      %p294 = scmp.lt.s32.totalorder %s23, 3
      %p295 = pnand %p293, %p294
      %p296 = pneg %p295
      // Predicated region
      $region9: #{dfnn_forward.1} parent=5 // pred_check
        _
      $region10: #{dfnn_forward.1} parent=5 // pred_check_branch
        %298 = sbr.rel (%p295) target = $region12
      $region11: #{dfnn_forward.1} parent=5 // pred_region
        %s299 = ssub.s32 %s23, 1
        // Predicated region
        $region13: #{dfnn_forward.1} parent=11 // pred_check
          %p300 = pneg %p70
        $region14: #{dfnn_forward.1} parent=11 // pred_check_branch
          %302 = sbr.rel (%p300) target = $region16
        $region15: #{dfnn_forward.1} parent=11 // pred_region
          _
        $region16: #{dfnn_forward.1} parent=11 // pred_fallthru
          _
        // Predicated region
        $region17: #{dfnn_forward.1} parent=11 // pred_check
          %p303 = pneg %p91
        $region18: #{dfnn_forward.1} parent=11 // pred_check_branch
          %305 = sbr.rel (%p303) target = $region20
        $region19: #{dfnn_forward.1} parent=11 // pred_region
          _
        $region20: #{dfnn_forward.1} parent=11 // pred_fallthru
          _
        // Predicated region
        $region21: #{dfnn_forward.1} parent=11 // pred_check
          %p306 = pneg %p112
        $region22: #{dfnn_forward.1} parent=11 // pred_check_branch
          %308 = sbr.rel (%p306) target = $region24
        $region23: #{dfnn_forward.1} parent=11 // pred_region
          _
        $region24: #{dfnn_forward.1} parent=11 // pred_fallthru
          _
        // Predicated region
        $region25: #{dfnn_forward.1} parent=11 // pred_check
          %p309 = pneg %p133
        $region26: #{dfnn_forward.1} parent=11 // pred_check_branch
          %311 = sbr.rel (%p309) target = $region28
        $region27: #{dfnn_forward.1} parent=11 // pred_region
          _
        $region28: #{dfnn_forward.1} parent=11 // pred_fallthru
          _
        // Predicated region
        $region29: #{dfnn_forward.1} parent=11 // pred_check
          %p312 = pneg %p154
        $region30: #{dfnn_forward.1} parent=11 // pred_check_branch
          %314 = sbr.rel (%p312) target = $region32
        $region31: #{dfnn_forward.1} parent=11 // pred_region
          _
        $region32: #{dfnn_forward.1} parent=11 // pred_fallthru
          _
        // Predicated region
        $region33: #{dfnn_forward.1} parent=11 // pred_check
          %p315 = pneg %p175
        $region34: #{dfnn_forward.1} parent=11 // pred_check_branch
          %317 = sbr.rel (%p315) target = $region36
        $region35: #{dfnn_forward.1} parent=11 // pred_region
          _
        $region36: #{dfnn_forward.1} parent=11 // pred_fallthru
          _
        // Predicated region
        $region37: #{dfnn_forward.1} parent=11 // pred_check
          %p318 = pneg %p196
        $region38: #{dfnn_forward.1} parent=11 // pred_check_branch
          %320 = sbr.rel (%p318) target = $region40
        $region39: #{dfnn_forward.1} parent=11 // pred_region
          _
        $region40: #{dfnn_forward.1} parent=11 // pred_fallthru
          _
        // Predicated region
        $region41: #{dfnn_forward.1} parent=11 // pred_check
          %p321 = pneg %p217
        $region42: #{dfnn_forward.1} parent=11 // pred_check_branch
          %323 = sbr.rel (%p321) target = $region44
        $region43: #{dfnn_forward.1} parent=11 // pred_region
          _
        $region44: #{dfnn_forward.1} parent=11 // pred_fallthru
          _
        // Predicated region
        $region45: #{dfnn_forward.1} parent=11 // pred_check
          %p324 = pneg %p238
        $region46: #{dfnn_forward.1} parent=11 // pred_check_branch
          %326 = sbr.rel (%p324) target = $region48
        $region47: #{dfnn_forward.1} parent=11 // pred_region
          _
        $region48: #{dfnn_forward.1} parent=11 // pred_fallthru
          _
        // Predicated region
        $region49: #{dfnn_forward.1} parent=11 // pred_check
          %p327 = pneg %p259
        $region50: #{dfnn_forward.1} parent=11 // pred_check_branch
          %329 = sbr.rel (%p327) target = $region52
        $region51: #{dfnn_forward.1} parent=11 // pred_region
          _
        $region52: #{dfnn_forward.1} parent=11 // pred_fallthru
          _
      $region12: #{dfnn_forward.1} parent=5 // pred_fallthru
        _
      %p330 = scmp.lt.s32.totalorder %s23, 2
      // Predicated region
      $region53: #{dfnn_forward.1} parent=5 // pred_check
        %p331 = pneg %p330
      $region54: #{dfnn_forward.1} parent=5 // pred_check_branch
        %333 = sbr.rel (%p331) target = $region56
      $region55: #{dfnn_forward.1} parent=5 // pred_region
        // Predicated region
        $region57: #{dfnn_forward.1} parent=55 // pred_check
          %p334 = pneg %p43
        $region58: #{dfnn_forward.1} parent=55 // pred_check_branch
          %336 = sbr.rel (%p334) target = $region60
        $region59: #{dfnn_forward.1} parent=55 // pred_region
          %s337 = sand.u32 %s33, 1
          %s338 = scalar_lea.sflag [#allocation3], %s337
          %s339 = sand.u32 %s33, 1
          %s340 = smul.addr %s339, 24
          %s341 = scalar_lea.vmem [#allocation2], %s340
          %343 = vsyncadd %s338, 0
          %s344 = smul.addr %s23, 8
          %s345 = scalar_lea.hbm %s0, %s344
          %s346 = sshll.u32 %s345, 4
          %s347 = int_to_ptr.hbm [resolvable:$true] %s346
          %s348 = sshll.u32 %s341, 4
          %s349 = int_to_ptr.vmem [resolvable:$true] %s348
          %354 = dma.hbm_to_vmem [thread:$0]  %s347, 384, %s349, %s338, 256, 128, 8
        $region60: #{dfnn_forward.1} parent=55 // pred_fallthru
          _
      $region56: #{dfnn_forward.1} parent=5 // pred_fallthru
        _
      %p355 = scmp.le.s32.totalorder 1, %s23
      %p356 = scmp.lt.s32.totalorder %s23, 3
      %p357 = pnand %p355, %p356
      %p358 = pneg %p357
      // Predicated region
      $region61: #{dfnn_forward.1} parent=5 // pred_check
        _
      $region62: #{dfnn_forward.1} parent=5 // pred_check_branch
        %360 = sbr.rel (%p357) target = $region64
      $region63: #{dfnn_forward.1} parent=5 // pred_region
        %s361 = ssub.s32 %s23, 1
        %s362 = sand.u32 %s36, 1
        %s363 = scalar_lea.sflag [#allocation3], %s362
        %s364 = sand.u32 %s36, 1
        %s365 = smul.addr %s364, 24
        %s366 = scalar_lea.vmem [#allocation2], %s365
        // Predicated region
        $region65: #{dfnn_forward.1} parent=63 // pred_check
          %p367 = pneg %p49
        $region66: #{dfnn_forward.1} parent=63 // pred_check_branch
          %369 = sbr.rel (%p367) target = $region68
        $region67: #{dfnn_forward.1} parent=63 // pred_region
          %371 = dma.done %s363, 384
        $region68: #{dfnn_forward.1} parent=63 // pred_fallthru
          _
        %s372 = sand.u32 %s36, 1
        %s373 = scalar_lea.sflag [#allocation3], %s372
        %s374 = sand.u32 %s36, 1
        %s375 = smul.addr %s374, 24
        %s376 = scalar_lea.vmem [#allocation2], %s375
        %p377 = pneg %p49
        %p378 = pneg %p46
        %p379 = pneg %p70
        %p380 = pneg %p67
        %p381 = pneg %p91
        %p382 = pneg %p88
        %p383 = pneg %p112
        %p384 = pneg %p109
        %p385 = pneg %p133
        %p386 = pneg %p130
        %p387 = pneg %p154
        %p388 = pneg %p151
        %p389 = pneg %p175
        %p390 = pneg %p172
        %p391 = pneg %p196
        %p392 = pneg %p193
        %p393 = pneg %p217
        %p394 = pneg %p214
        %p395 = pneg %p238
        %p396 = pneg %p235
        %p397 = pneg %p259
        %p398 = pneg %p256
        %p399 = pneg %p285
        %p400 = pneg %p282
        %s401 = sand.u32 %s272, 1
        %s402 = scalar_lea.sflag [#allocation4], %s401
        %s403 = sand.u32 %s272, 1
        %s404 = smul.addr %s403, 8
        %s405 = scalar_lea.vmem [#allocation5], %s404
        %v406 = vld [vmem:[%s366] sm:$0xff]
        %v407 = vld [vmem:[%s366 + $0x8] sm:$0xff]
        %v408 = vld [vmem:[%s366 + $0x10] sm:$0x1]
        %v409 = vld [vmem:[%s1] sm:$0xff]
        %v410 = vld [vmem:[%s1 + $0x8] sm:$0x7f]
        %v411 = vld [vmem:[%s2] sm:$0xff]
        %v412 = vld [vmem:[%s2 + $0x8] sm:$0x7f]
        %414 = vset.pattern.permute.xlu0 0
        %415 = vperm.xlu0 %414, %v411
        %v416 = vpop.permute.xlu0 %415
        %419 = vset.pattern.permute.xlu0 0
        %420 = vperm.xlu0 %419, %v412
        %v421 = vpop.permute.xlu0 %420
        %vm423 = vcmask 138240
        %v425 = vsel %vm423, %v409, 0
        %v428 = vsel %vm423, %v410, 0
        %vm430 = vcmask 1040384
        %v432 = vsel %vm430, %v408, 0
        %434 = vmatpush.msra.mxu0 0.0
        %435 = vmatpush.msra.mxu0 0.0
        %436 = vmatpush.msra.mxu0 0.0
        %437 = vmatpush.msra.mxu0 0.0
        %438 = vmatpush.msra.mxu0 0.0
        %439 = vmatpush.msra.mxu0 0.0
        %440 = vmatpush.msra.mxu0 0.0
        %441 = vmatpush.msra.mxu0 0.0
        %442 = vmatpush.msra.mxu0 0.0
        %443 = vmatpush.msra.mxu0 0.0
        %444 = vmatpush.msra.mxu0 0.0
        %445 = vmatpush.msra.mxu0 0.0
        %446 = vmatpush.msra.mxu0 0.0
        %v447 = vand.u32 %v432, 4294901760
        %448 = vmatpush.msra.mxu0 %v447
        %v449 = vand.u32 %v407, 4294901760
        %450 = vmatpush.msra.mxu0 %v449
        %v451 = vand.u32 %v406, 4294901760
        %452 = vmatpush.msra.mxu0 %v451
        %v453 = vand.u32 %v425, 4294901760
        %v454 = vsub.f32 %v425, %v453
        %v455 = vand.u32 %v454, 4294901760
        %v456 = vsub.f32 %v454, %v455
        %v457 = vand.u32 %v456, 4294901760
        %458 = vmatmul.f32.gmra.mxu0 %v457
        %v459 = vpop.f32.mrf.mxu0
        %v460 = vadd.f32 %v416, %v459
        %v461 = vand.u32 %v428, 4294901760
        %v462 = vsub.f32 %v428, %v461
        %v463 = vand.u32 %v462, 4294901760
        %v464 = vsub.f32 %v462, %v463
        %v465 = vand.u32 %v464, 4294901760
        %466 = vmatmul.f32.gmra.mxu0 %v465
        %v467 = vpop.f32.mrf.mxu0
        %v468 = vadd.f32 %v421, %v467
        %469 = vdwg.mxu0
        %470 = vmatpush.msra.mxu0 0.0
        %471 = vmatpush.msra.mxu0 0.0
        %472 = vmatpush.msra.mxu0 0.0
        %473 = vmatpush.msra.mxu0 0.0
        %474 = vmatpush.msra.mxu0 0.0
        %475 = vmatpush.msra.mxu0 0.0
        %476 = vmatpush.msra.mxu0 0.0
        %477 = vmatpush.msra.mxu0 0.0
        %478 = vmatpush.msra.mxu0 0.0
        %479 = vmatpush.msra.mxu0 0.0
        %480 = vmatpush.msra.mxu0 0.0
        %481 = vmatpush.msra.mxu0 0.0
        %482 = vmatpush.msra.mxu0 0.0
        %v483 = vand.u32 %v432, 4294901760
        %v484 = vsub.f32 %v432, %v483
        %v485 = vand.u32 %v484, 4294901760
        %v486 = vsub.f32 %v484, %v485
        %v487 = vand.u32 %v486, 4294901760
        %488 = vmatpush.msra.mxu0 %v487
        %v489 = vand.u32 %v407, 4294901760
        %v490 = vsub.f32 %v407, %v489
        %v491 = vand.u32 %v490, 4294901760
        %v492 = vsub.f32 %v490, %v491
        %v493 = vand.u32 %v492, 4294901760
        %494 = vmatpush.msra.mxu0 %v493
        %v495 = vand.u32 %v406, 4294901760
        %v496 = vsub.f32 %v406, %v495
        %v497 = vand.u32 %v496, 4294901760
        %v498 = vsub.f32 %v496, %v497
        %v499 = vand.u32 %v498, 4294901760
        %500 = vmatpush.msra.mxu0 %v499
        %v501 = vand.u32 %v425, 4294901760
        %502 = vmatmul.f32.gmra.mxu0 %v501
        %v503 = vpop.f32.mrf.mxu0
        %v504 = vadd.f32 %v460, %v503
        %v505 = vand.u32 %v428, 4294901760
        %506 = vmatmul.f32.gmra.mxu0 %v505
        %v507 = vpop.f32.mrf.mxu0
        %v508 = vadd.f32 %v468, %v507
        %509 = vdwg.mxu0
        %510 = vmatpush.msra.mxu0 0.0
        %511 = vmatpush.msra.mxu0 0.0
        %512 = vmatpush.msra.mxu0 0.0
        %513 = vmatpush.msra.mxu0 0.0
        %514 = vmatpush.msra.mxu0 0.0
        %515 = vmatpush.msra.mxu0 0.0
        %516 = vmatpush.msra.mxu0 0.0
        %517 = vmatpush.msra.mxu0 0.0
        %518 = vmatpush.msra.mxu0 0.0
        %519 = vmatpush.msra.mxu0 0.0
        %520 = vmatpush.msra.mxu0 0.0
        %521 = vmatpush.msra.mxu0 0.0
        %522 = vmatpush.msra.mxu0 0.0
        %v523 = vand.u32 %v432, 4294901760
        %v524 = vsub.f32 %v432, %v523
        %525 = vmatpush.msra.mxu0 %v524
        %v526 = vand.u32 %v407, 4294901760
        %v527 = vsub.f32 %v407, %v526
        %528 = vmatpush.msra.mxu0 %v527
        %v529 = vand.u32 %v406, 4294901760
        %v530 = vsub.f32 %v406, %v529
        %531 = vmatpush.msra.mxu0 %v530
        %v532 = vand.u32 %v425, 4294901760
        %v533 = vsub.f32 %v425, %v532
        %534 = vmatmul.f32.gmra.mxu0 %v533
        %v535 = vpop.f32.mrf.mxu0
        %v536 = vadd.f32 %v504, %v535
        %v537 = vand.u32 %v428, 4294901760
        %v538 = vsub.f32 %v428, %v537
        %539 = vmatmul.f32.gmra.mxu0 %v538
        %v540 = vpop.f32.mrf.mxu0
        %v541 = vadd.f32 %v508, %v540
        %542 = vdwg.mxu0
        %543 = vmatpush.msra.mxu0 0.0
        %544 = vmatpush.msra.mxu0 0.0
        %545 = vmatpush.msra.mxu0 0.0
        %546 = vmatpush.msra.mxu0 0.0
        %547 = vmatpush.msra.mxu0 0.0
        %548 = vmatpush.msra.mxu0 0.0
        %549 = vmatpush.msra.mxu0 0.0
        %550 = vmatpush.msra.mxu0 0.0
        %551 = vmatpush.msra.mxu0 0.0
        %552 = vmatpush.msra.mxu0 0.0
        %553 = vmatpush.msra.mxu0 0.0
        %554 = vmatpush.msra.mxu0 0.0
        %555 = vmatpush.msra.mxu0 0.0
        %v556 = vand.u32 %v432, 4294901760
        %557 = vmatpush.msra.mxu0 %v556
        %v558 = vand.u32 %v407, 4294901760
        %559 = vmatpush.msra.mxu0 %v558
        %v560 = vand.u32 %v406, 4294901760
        %561 = vmatpush.msra.mxu0 %v560
        %v562 = vand.u32 %v425, 4294901760
        %v563 = vsub.f32 %v425, %v562
        %v564 = vand.u32 %v563, 4294901760
        %565 = vmatmul.f32.gmra.mxu0 %v564
        %v566 = vpop.f32.mrf.mxu0
        %v567 = vadd.f32 %v536, %v566
        %v568 = vand.u32 %v428, 4294901760
        %v569 = vsub.f32 %v428, %v568
        %v570 = vand.u32 %v569, 4294901760
        %571 = vmatmul.f32.gmra.mxu0 %v570
        %v572 = vpop.f32.mrf.mxu0
        %v573 = vadd.f32 %v541, %v572
        %574 = vdwg.mxu0
        %575 = vmatpush.msra.mxu0 0.0
        %576 = vmatpush.msra.mxu0 0.0
        %577 = vmatpush.msra.mxu0 0.0
        %578 = vmatpush.msra.mxu0 0.0
        %579 = vmatpush.msra.mxu0 0.0
        %580 = vmatpush.msra.mxu0 0.0
        %581 = vmatpush.msra.mxu0 0.0
        %582 = vmatpush.msra.mxu0 0.0
        %583 = vmatpush.msra.mxu0 0.0
        %584 = vmatpush.msra.mxu0 0.0
        %585 = vmatpush.msra.mxu0 0.0
        %586 = vmatpush.msra.mxu0 0.0
        %587 = vmatpush.msra.mxu0 0.0
        %v588 = vand.u32 %v432, 4294901760
        %v589 = vsub.f32 %v432, %v588
        %v590 = vand.u32 %v589, 4294901760
        %591 = vmatpush.msra.mxu0 %v590
        %v592 = vand.u32 %v407, 4294901760
        %v593 = vsub.f32 %v407, %v592
        %v594 = vand.u32 %v593, 4294901760
        %595 = vmatpush.msra.mxu0 %v594
        %v596 = vand.u32 %v406, 4294901760
        %v597 = vsub.f32 %v406, %v596
        %v598 = vand.u32 %v597, 4294901760
        %599 = vmatpush.msra.mxu0 %v598
        %v600 = vand.u32 %v425, 4294901760
        %601 = vmatmul.f32.gmra.mxu0 %v600
        %v602 = vpop.f32.mrf.mxu0
        %v603 = vadd.f32 %v567, %v602
        %v604 = vand.u32 %v428, 4294901760
        %605 = vmatmul.f32.gmra.mxu0 %v604
        %v606 = vpop.f32.mrf.mxu0
        %v607 = vadd.f32 %v573, %v606
        %608 = vdwg.mxu0
        %609 = vmatpush.msra.mxu0 0.0
        %610 = vmatpush.msra.mxu0 0.0
        %611 = vmatpush.msra.mxu0 0.0
        %612 = vmatpush.msra.mxu0 0.0
        %613 = vmatpush.msra.mxu0 0.0
        %614 = vmatpush.msra.mxu0 0.0
        %615 = vmatpush.msra.mxu0 0.0
        %616 = vmatpush.msra.mxu0 0.0
        %617 = vmatpush.msra.mxu0 0.0
        %618 = vmatpush.msra.mxu0 0.0
        %619 = vmatpush.msra.mxu0 0.0
        %620 = vmatpush.msra.mxu0 0.0
        %621 = vmatpush.msra.mxu0 0.0
        %v622 = vand.u32 %v432, 4294901760
        %623 = vmatpush.msra.mxu0 %v622
        %v624 = vand.u32 %v407, 4294901760
        %625 = vmatpush.msra.mxu0 %v624
        %v626 = vand.u32 %v406, 4294901760
        %627 = vmatpush.msra.mxu0 %v626
        %v628 = vand.u32 %v425, 4294901760
        %629 = vmatmul.f32.gmra.mxu0 %v628
        %v630 = vpop.f32.mrf.mxu0
        %v631 = vadd.f32 %v603, %v630
        %v632 = vand.u32 %v428, 4294901760
        %633 = vmatmul.f32.gmra.mxu0 %v632
        %v634 = vpop.f32.mrf.mxu0
        %v635 = vadd.f32 %v607, %v634
        %636 = vdwg.mxu0
        %vm637 = vcmp.ge.f32.partialorder %v631, 0.0
        %vm638 = vcmp.ge.f32.partialorder %v635, 0.0
        %v639 = vmul.f32 %v631, 0.2
        %v640 = vmul.f32 %v635, 0.2
        %v641 = vsel %vm637, %v631, %v639
        %v642 = vsel %vm638, %v635, %v640
        %v643 = vld [vmem:[%s3] sm:$0xff]
        %v644 = vld [vmem:[%s3 + $0x8] sm:$0x1f]
        %v645 = vld [vmem:[%s4] sm:$0xff]
        %v646 = vld [vmem:[%s4 + $0x8] sm:$0x1f]
        %648 = vset.pattern.permute.xlu0 0
        %649 = vperm.xlu0 %648, %v645
        %v650 = vpop.permute.xlu0 %649
        %653 = vset.pattern.permute.xlu0 0
        %654 = vperm.xlu0 %653, %v646
        %v655 = vpop.permute.xlu0 %654
        %vm657 = vcmask 121856
        %v659 = vsel %vm657, %v643, 0
        %v662 = vsel %vm657, %v644, 0
        %vm664 = vcmask 1046528
        %v666 = vsel %vm664, %v642, 0
        %668 = vmatpush.msra.mxu0 0.0
        %669 = vmatpush.msra.mxu0 0.0
        %670 = vmatpush.msra.mxu0 0.0
        %671 = vmatpush.msra.mxu0 0.0
        %672 = vmatpush.msra.mxu0 0.0
        %673 = vmatpush.msra.mxu0 0.0
        %674 = vmatpush.msra.mxu0 0.0
        %675 = vmatpush.msra.mxu0 0.0
        %676 = vmatpush.msra.mxu0 0.0
        %677 = vmatpush.msra.mxu0 0.0
        %678 = vmatpush.msra.mxu0 0.0
        %679 = vmatpush.msra.mxu0 0.0
        %680 = vmatpush.msra.mxu0 0.0
        %681 = vmatpush.msra.mxu0 0.0
        %v682 = vand.u32 %v666, 4294901760
        %683 = vmatpush.msra.mxu0 %v682
        %v684 = vand.u32 %v641, 4294901760
        %685 = vmatpush.msra.mxu0 %v684
        %v686 = vand.u32 %v659, 4294901760
        %v687 = vsub.f32 %v659, %v686
        %v688 = vand.u32 %v687, 4294901760
        %v689 = vsub.f32 %v687, %v688
        %v690 = vand.u32 %v689, 4294901760
        %691 = vmatmul.f32.gmra.mxu0 %v690
        %v692 = vpop.f32.mrf.mxu0
        %v693 = vadd.f32 %v650, %v692
        %v694 = vand.u32 %v662, 4294901760
        %v695 = vsub.f32 %v662, %v694
        %v696 = vand.u32 %v695, 4294901760
        %v697 = vsub.f32 %v695, %v696
        %v698 = vand.u32 %v697, 4294901760
        %699 = vmatmul.f32.gmra.mxu0 %v698
        %v700 = vpop.f32.mrf.mxu0
        %v701 = vadd.f32 %v655, %v700
        %702 = vdwg.mxu0
        %703 = vmatpush.msra.mxu0 0.0
        %704 = vmatpush.msra.mxu0 0.0
        %705 = vmatpush.msra.mxu0 0.0
        %706 = vmatpush.msra.mxu0 0.0
        %707 = vmatpush.msra.mxu0 0.0
        %708 = vmatpush.msra.mxu0 0.0
        %709 = vmatpush.msra.mxu0 0.0
        %710 = vmatpush.msra.mxu0 0.0
        %711 = vmatpush.msra.mxu0 0.0
        %712 = vmatpush.msra.mxu0 0.0
        %713 = vmatpush.msra.mxu0 0.0
        %714 = vmatpush.msra.mxu0 0.0
        %715 = vmatpush.msra.mxu0 0.0
        %716 = vmatpush.msra.mxu0 0.0
        %v717 = vand.u32 %v666, 4294901760
        %v718 = vsub.f32 %v666, %v717
        %v719 = vand.u32 %v718, 4294901760
        %v720 = vsub.f32 %v718, %v719
        %v721 = vand.u32 %v720, 4294901760
        %722 = vmatpush.msra.mxu0 %v721
        %v723 = vand.u32 %v641, 4294901760
        %v724 = vsub.f32 %v641, %v723
        %v725 = vand.u32 %v724, 4294901760
        %v726 = vsub.f32 %v724, %v725
        %v727 = vand.u32 %v726, 4294901760
        %728 = vmatpush.msra.mxu0 %v727
        %v729 = vand.u32 %v659, 4294901760
        %730 = vmatmul.f32.gmra.mxu0 %v729
        %v731 = vpop.f32.mrf.mxu0
        %v732 = vadd.f32 %v693, %v731
        %v733 = vand.u32 %v662, 4294901760
        %734 = vmatmul.f32.gmra.mxu0 %v733
        %v735 = vpop.f32.mrf.mxu0
        %v736 = vadd.f32 %v701, %v735
        %737 = vdwg.mxu0
        %738 = vmatpush.msra.mxu0 0.0
        %739 = vmatpush.msra.mxu0 0.0
        %740 = vmatpush.msra.mxu0 0.0
        %741 = vmatpush.msra.mxu0 0.0
        %742 = vmatpush.msra.mxu0 0.0
        %743 = vmatpush.msra.mxu0 0.0
        %744 = vmatpush.msra.mxu0 0.0
        %745 = vmatpush.msra.mxu0 0.0
        %746 = vmatpush.msra.mxu0 0.0
        %747 = vmatpush.msra.mxu0 0.0
        %748 = vmatpush.msra.mxu0 0.0
        %749 = vmatpush.msra.mxu0 0.0
        %750 = vmatpush.msra.mxu0 0.0
        %751 = vmatpush.msra.mxu0 0.0
        %v752 = vand.u32 %v666, 4294901760
        %v753 = vsub.f32 %v666, %v752
        %754 = vmatpush.msra.mxu0 %v753
        %v755 = vand.u32 %v641, 4294901760
        %v756 = vsub.f32 %v641, %v755
        %757 = vmatpush.msra.mxu0 %v756
        %v758 = vand.u32 %v659, 4294901760
        %v759 = vsub.f32 %v659, %v758
        %760 = vmatmul.f32.gmra.mxu0 %v759
        %v761 = vpop.f32.mrf.mxu0
        %v762 = vadd.f32 %v732, %v761
        %v763 = vand.u32 %v662, 4294901760
        %v764 = vsub.f32 %v662, %v763
        %765 = vmatmul.f32.gmra.mxu0 %v764
        %v766 = vpop.f32.mrf.mxu0
        %v767 = vadd.f32 %v736, %v766
        %768 = vdwg.mxu0
        %769 = vmatpush.msra.mxu0 0.0
        %770 = vmatpush.msra.mxu0 0.0
        %771 = vmatpush.msra.mxu0 0.0
        %772 = vmatpush.msra.mxu0 0.0
        %773 = vmatpush.msra.mxu0 0.0
        %774 = vmatpush.msra.mxu0 0.0
        %775 = vmatpush.msra.mxu0 0.0
        %776 = vmatpush.msra.mxu0 0.0
        %777 = vmatpush.msra.mxu0 0.0
        %778 = vmatpush.msra.mxu0 0.0
        %779 = vmatpush.msra.mxu0 0.0
        %780 = vmatpush.msra.mxu0 0.0
        %781 = vmatpush.msra.mxu0 0.0
        %782 = vmatpush.msra.mxu0 0.0
        %v783 = vand.u32 %v666, 4294901760
        %784 = vmatpush.msra.mxu0 %v783
        %v785 = vand.u32 %v641, 4294901760
        %786 = vmatpush.msra.mxu0 %v785
        %v787 = vand.u32 %v659, 4294901760
        %v788 = vsub.f32 %v659, %v787
        %v789 = vand.u32 %v788, 4294901760
        %790 = vmatmul.f32.gmra.mxu0 %v789
        %v791 = vpop.f32.mrf.mxu0
        %v792 = vadd.f32 %v762, %v791
        %v793 = vand.u32 %v662, 4294901760
        %v794 = vsub.f32 %v662, %v793
        %v795 = vand.u32 %v794, 4294901760
        %796 = vmatmul.f32.gmra.mxu0 %v795
        %v797 = vpop.f32.mrf.mxu0
        %v798 = vadd.f32 %v767, %v797
        %799 = vdwg.mxu0
        %800 = vmatpush.msra.mxu0 0.0
        %801 = vmatpush.msra.mxu0 0.0
        %802 = vmatpush.msra.mxu0 0.0
        %803 = vmatpush.msra.mxu0 0.0
        %804 = vmatpush.msra.mxu0 0.0
        %805 = vmatpush.msra.mxu0 0.0
        %806 = vmatpush.msra.mxu0 0.0
        %807 = vmatpush.msra.mxu0 0.0
        %808 = vmatpush.msra.mxu0 0.0
        %809 = vmatpush.msra.mxu0 0.0
        %810 = vmatpush.msra.mxu0 0.0
        %811 = vmatpush.msra.mxu0 0.0
        %812 = vmatpush.msra.mxu0 0.0
        %813 = vmatpush.msra.mxu0 0.0
        %v814 = vand.u32 %v666, 4294901760
        %v815 = vsub.f32 %v666, %v814
        %v816 = vand.u32 %v815, 4294901760
        %817 = vmatpush.msra.mxu0 %v816
        %v818 = vand.u32 %v641, 4294901760
        %v819 = vsub.f32 %v641, %v818
        %v820 = vand.u32 %v819, 4294901760
        %821 = vmatpush.msra.mxu0 %v820
        %v822 = vand.u32 %v659, 4294901760
        %823 = vmatmul.f32.gmra.mxu0 %v822
        %v824 = vpop.f32.mrf.mxu0
        %v825 = vadd.f32 %v792, %v824
        %v826 = vand.u32 %v662, 4294901760
        %827 = vmatmul.f32.gmra.mxu0 %v826
        %v828 = vpop.f32.mrf.mxu0
        %v829 = vadd.f32 %v798, %v828
        %830 = vdwg.mxu0
        %831 = vmatpush.msra.mxu0 0.0
        %832 = vmatpush.msra.mxu0 0.0
        %833 = vmatpush.msra.mxu0 0.0
        %834 = vmatpush.msra.mxu0 0.0
        %835 = vmatpush.msra.mxu0 0.0
        %836 = vmatpush.msra.mxu0 0.0
        %837 = vmatpush.msra.mxu0 0.0
        %838 = vmatpush.msra.mxu0 0.0
        %839 = vmatpush.msra.mxu0 0.0
        %840 = vmatpush.msra.mxu0 0.0
        %841 = vmatpush.msra.mxu0 0.0
        %842 = vmatpush.msra.mxu0 0.0
        %843 = vmatpush.msra.mxu0 0.0
        %844 = vmatpush.msra.mxu0 0.0
        %v845 = vand.u32 %v666, 4294901760
        %846 = vmatpush.msra.mxu0 %v845
        %v847 = vand.u32 %v641, 4294901760
        %848 = vmatpush.msra.mxu0 %v847
        %v849 = vand.u32 %v659, 4294901760
        %850 = vmatmul.f32.gmra.mxu0 %v849
        %v851 = vpop.f32.mrf.mxu0
        %v852 = vadd.f32 %v825, %v851
        %v853 = vand.u32 %v662, 4294901760
        %854 = vmatmul.f32.gmra.mxu0 %v853
        %v855 = vpop.f32.mrf.mxu0
        %v856 = vadd.f32 %v829, %v855
        %857 = vdwg.mxu0
        %vm858 = vcmp.ge.f32.partialorder %v852, 0.0
        %vm859 = vcmp.ge.f32.partialorder %v856, 0.0
        %v860 = vmul.f32 %v852, 0.2
        %v861 = vmul.f32 %v856, 0.2
        %v862 = vsel %vm858, %v852, %v860
        %v863 = vsel %vm859, %v856, %v861
        %v864 = vld [vmem:[%s5] sm:$0xff]
        %v865 = vld [vmem:[%s5 + $0x8] sm:$0x7]
        %v866 = vld [vmem:[%s6] sm:$0xff]
        %v867 = vld [vmem:[%s6 + $0x8] sm:$0x7]
        %869 = vset.pattern.permute.xlu0 0
        %870 = vperm.xlu0 %869, %v866
        %v871 = vpop.permute.xlu0 %870
        %874 = vset.pattern.permute.xlu0 0
        %875 = vperm.xlu0 %874, %v867
        %v876 = vpop.permute.xlu0 %875
        %vm878 = vcmask 105472
        %v880 = vsel %vm878, %v864, 0
        %v883 = vsel %vm878, %v865, 0
        %vm885 = vcmask 1044480
        %v887 = vsel %vm885, %v863, 0
        %889 = vmatpush.msra.mxu0 0.0
        %890 = vmatpush.msra.mxu0 0.0
        %891 = vmatpush.msra.mxu0 0.0
        %892 = vmatpush.msra.mxu0 0.0
        %893 = vmatpush.msra.mxu0 0.0
        %894 = vmatpush.msra.mxu0 0.0
        %895 = vmatpush.msra.mxu0 0.0
        %896 = vmatpush.msra.mxu0 0.0
        %897 = vmatpush.msra.mxu0 0.0
        %898 = vmatpush.msra.mxu0 0.0
        %899 = vmatpush.msra.mxu0 0.0
        %900 = vmatpush.msra.mxu0 0.0
        %901 = vmatpush.msra.mxu0 0.0
        %902 = vmatpush.msra.mxu0 0.0
        %v903 = vand.u32 %v887, 4294901760
        %904 = vmatpush.msra.mxu0 %v903
        %v905 = vand.u32 %v862, 4294901760
        %906 = vmatpush.msra.mxu0 %v905
        %v907 = vand.u32 %v880, 4294901760
        %v908 = vsub.f32 %v880, %v907
        %v909 = vand.u32 %v908, 4294901760
        %v910 = vsub.f32 %v908, %v909
        %v911 = vand.u32 %v910, 4294901760
        %912 = vmatmul.f32.gmra.mxu0 %v911
        %v913 = vpop.f32.mrf.mxu0
        %v914 = vadd.f32 %v871, %v913
        %v915 = vand.u32 %v883, 4294901760
        %v916 = vsub.f32 %v883, %v915
        %v917 = vand.u32 %v916, 4294901760
        %v918 = vsub.f32 %v916, %v917
        %v919 = vand.u32 %v918, 4294901760
        %920 = vmatmul.f32.gmra.mxu0 %v919
        %v921 = vpop.f32.mrf.mxu0
        %v922 = vadd.f32 %v876, %v921
        %923 = vdwg.mxu0
        %924 = vmatpush.msra.mxu0 0.0
        %925 = vmatpush.msra.mxu0 0.0
        %926 = vmatpush.msra.mxu0 0.0
        %927 = vmatpush.msra.mxu0 0.0
        %928 = vmatpush.msra.mxu0 0.0
        %929 = vmatpush.msra.mxu0 0.0
        %930 = vmatpush.msra.mxu0 0.0
        %931 = vmatpush.msra.mxu0 0.0
        %932 = vmatpush.msra.mxu0 0.0
        %933 = vmatpush.msra.mxu0 0.0
        %934 = vmatpush.msra.mxu0 0.0
        %935 = vmatpush.msra.mxu0 0.0
        %936 = vmatpush.msra.mxu0 0.0
        %937 = vmatpush.msra.mxu0 0.0
        %v938 = vand.u32 %v887, 4294901760
        %v939 = vsub.f32 %v887, %v938
        %v940 = vand.u32 %v939, 4294901760
        %v941 = vsub.f32 %v939, %v940
        %v942 = vand.u32 %v941, 4294901760
        %943 = vmatpush.msra.mxu0 %v942
        %v944 = vand.u32 %v862, 4294901760
        %v945 = vsub.f32 %v862, %v944
        %v946 = vand.u32 %v945, 4294901760
        %v947 = vsub.f32 %v945, %v946
        %v948 = vand.u32 %v947, 4294901760
        %949 = vmatpush.msra.mxu0 %v948
        %v950 = vand.u32 %v880, 4294901760
        %951 = vmatmul.f32.gmra.mxu0 %v950
        %v952 = vpop.f32.mrf.mxu0
        %v953 = vadd.f32 %v914, %v952
        %v954 = vand.u32 %v883, 4294901760
        %955 = vmatmul.f32.gmra.mxu0 %v954
        %v956 = vpop.f32.mrf.mxu0
        %v957 = vadd.f32 %v922, %v956
        %958 = vdwg.mxu0
        %959 = vmatpush.msra.mxu0 0.0
        %960 = vmatpush.msra.mxu0 0.0
        %961 = vmatpush.msra.mxu0 0.0
        %962 = vmatpush.msra.mxu0 0.0
        %963 = vmatpush.msra.mxu0 0.0
        %964 = vmatpush.msra.mxu0 0.0
        %965 = vmatpush.msra.mxu0 0.0
        %966 = vmatpush.msra.mxu0 0.0
        %967 = vmatpush.msra.mxu0 0.0
        %968 = vmatpush.msra.mxu0 0.0
        %969 = vmatpush.msra.mxu0 0.0
        %970 = vmatpush.msra.mxu0 0.0
        %971 = vmatpush.msra.mxu0 0.0
        %972 = vmatpush.msra.mxu0 0.0
        %v973 = vand.u32 %v887, 4294901760
        %v974 = vsub.f32 %v887, %v973
        %975 = vmatpush.msra.mxu0 %v974
        %v976 = vand.u32 %v862, 4294901760
        %v977 = vsub.f32 %v862, %v976
        %978 = vmatpush.msra.mxu0 %v977
        %v979 = vand.u32 %v880, 4294901760
        %v980 = vsub.f32 %v880, %v979
        %981 = vmatmul.f32.gmra.mxu0 %v980
        %v982 = vpop.f32.mrf.mxu0
        %v983 = vadd.f32 %v953, %v982
        %v984 = vand.u32 %v883, 4294901760
        %v985 = vsub.f32 %v883, %v984
        %986 = vmatmul.f32.gmra.mxu0 %v985
        %v987 = vpop.f32.mrf.mxu0
        %v988 = vadd.f32 %v957, %v987
        %989 = vdwg.mxu0
        %990 = vmatpush.msra.mxu0 0.0
        %991 = vmatpush.msra.mxu0 0.0
        %992 = vmatpush.msra.mxu0 0.0
        %993 = vmatpush.msra.mxu0 0.0
        %994 = vmatpush.msra.mxu0 0.0
        %995 = vmatpush.msra.mxu0 0.0
        %996 = vmatpush.msra.mxu0 0.0
        %997 = vmatpush.msra.mxu0 0.0
        %998 = vmatpush.msra.mxu0 0.0
        %999 = vmatpush.msra.mxu0 0.0
        %1000 = vmatpush.msra.mxu0 0.0
        %1001 = vmatpush.msra.mxu0 0.0
        %1002 = vmatpush.msra.mxu0 0.0
        %1003 = vmatpush.msra.mxu0 0.0
        %v1004 = vand.u32 %v887, 4294901760
        %1005 = vmatpush.msra.mxu0 %v1004
        %v1006 = vand.u32 %v862, 4294901760
        %1007 = vmatpush.msra.mxu0 %v1006
        %v1008 = vand.u32 %v880, 4294901760
        %v1009 = vsub.f32 %v880, %v1008
        %v1010 = vand.u32 %v1009, 4294901760
        %1011 = vmatmul.f32.gmra.mxu0 %v1010
        %v1012 = vpop.f32.mrf.mxu0
        %v1013 = vadd.f32 %v983, %v1012
        %v1014 = vand.u32 %v883, 4294901760
        %v1015 = vsub.f32 %v883, %v1014
        %v1016 = vand.u32 %v1015, 4294901760
        %1017 = vmatmul.f32.gmra.mxu0 %v1016
        %v1018 = vpop.f32.mrf.mxu0
        %v1019 = vadd.f32 %v988, %v1018
        %1020 = vdwg.mxu0
        %1021 = vmatpush.msra.mxu0 0.0
        %1022 = vmatpush.msra.mxu0 0.0
        %1023 = vmatpush.msra.mxu0 0.0
        %1024 = vmatpush.msra.mxu0 0.0
        %1025 = vmatpush.msra.mxu0 0.0
        %1026 = vmatpush.msra.mxu0 0.0
        %1027 = vmatpush.msra.mxu0 0.0
        %1028 = vmatpush.msra.mxu0 0.0
        %1029 = vmatpush.msra.mxu0 0.0
        %1030 = vmatpush.msra.mxu0 0.0
        %1031 = vmatpush.msra.mxu0 0.0
        %1032 = vmatpush.msra.mxu0 0.0
        %1033 = vmatpush.msra.mxu0 0.0
        %1034 = vmatpush.msra.mxu0 0.0
        %v1035 = vand.u32 %v887, 4294901760
        %v1036 = vsub.f32 %v887, %v1035
        %v1037 = vand.u32 %v1036, 4294901760
        %1038 = vmatpush.msra.mxu0 %v1037
        %v1039 = vand.u32 %v862, 4294901760
        %v1040 = vsub.f32 %v862, %v1039
        %v1041 = vand.u32 %v1040, 4294901760
        %1042 = vmatpush.msra.mxu0 %v1041
        %v1043 = vand.u32 %v880, 4294901760
        %1044 = vmatmul.f32.gmra.mxu0 %v1043
        %v1045 = vpop.f32.mrf.mxu0
        %v1046 = vadd.f32 %v1013, %v1045
        %v1047 = vand.u32 %v883, 4294901760
        %1048 = vmatmul.f32.gmra.mxu0 %v1047
        %v1049 = vpop.f32.mrf.mxu0
        %v1050 = vadd.f32 %v1019, %v1049
        %1051 = vdwg.mxu0
        %1052 = vmatpush.msra.mxu0 0.0
        %1053 = vmatpush.msra.mxu0 0.0
        %1054 = vmatpush.msra.mxu0 0.0
        %1055 = vmatpush.msra.mxu0 0.0
        %1056 = vmatpush.msra.mxu0 0.0
        %1057 = vmatpush.msra.mxu0 0.0
        %1058 = vmatpush.msra.mxu0 0.0
        %1059 = vmatpush.msra.mxu0 0.0
        %1060 = vmatpush.msra.mxu0 0.0
        %1061 = vmatpush.msra.mxu0 0.0
        %1062 = vmatpush.msra.mxu0 0.0
        %1063 = vmatpush.msra.mxu0 0.0
        %1064 = vmatpush.msra.mxu0 0.0
        %1065 = vmatpush.msra.mxu0 0.0
        %v1066 = vand.u32 %v887, 4294901760
        %1067 = vmatpush.msra.mxu0 %v1066
        %v1068 = vand.u32 %v862, 4294901760
        %1069 = vmatpush.msra.mxu0 %v1068
        %v1070 = vand.u32 %v880, 4294901760
        %1071 = vmatmul.f32.gmra.mxu0 %v1070
        %v1072 = vpop.f32.mrf.mxu0
        %v1073 = vadd.f32 %v1046, %v1072
        %v1074 = vand.u32 %v883, 4294901760
        %1075 = vmatmul.f32.gmra.mxu0 %v1074
        %v1076 = vpop.f32.mrf.mxu0
        %v1077 = vadd.f32 %v1050, %v1076
        %1078 = vdwg.mxu0
        %vm1079 = vcmp.ge.f32.partialorder %v1073, 0.0
        %vm1080 = vcmp.ge.f32.partialorder %v1077, 0.0
        %v1081 = vmul.f32 %v1073, 0.2
        %v1082 = vmul.f32 %v1077, 0.2
        %v1083 = vsel %vm1079, %v1073, %v1081
        %v1084 = vsel %vm1080, %v1077, %v1082
        %v1085 = vld [vmem:[%s7] sm:$0xff]
        %v1086 = vld [vmem:[%s7 + $0x8] sm:$0x1]
        %v1087 = vld [vmem:[%s8] sm:$0xff]
        %v1088 = vld [vmem:[%s8 + $0x8] sm:$0x1]
        %1090 = vset.pattern.permute.xlu0 0
        %1091 = vperm.xlu0 %1090, %v1087
        %v1092 = vpop.permute.xlu0 %1091
        %1095 = vset.pattern.permute.xlu0 0
        %1096 = vperm.xlu0 %1095, %v1088
        %v1097 = vpop.permute.xlu0 %1096
        %vm1099 = vcmask 89088
        %v1101 = vsel %vm1099, %v1085, 0
        %v1104 = vsel %vm1099, %v1086, 0
        %vm1106 = vcmask 1042432
        %v1108 = vsel %vm1106, %v1084, 0
        %1110 = vmatpush.msra.mxu0 0.0
        %1111 = vmatpush.msra.mxu0 0.0
        %1112 = vmatpush.msra.mxu0 0.0
        %1113 = vmatpush.msra.mxu0 0.0
        %1114 = vmatpush.msra.mxu0 0.0
        %1115 = vmatpush.msra.mxu0 0.0
        %1116 = vmatpush.msra.mxu0 0.0
        %1117 = vmatpush.msra.mxu0 0.0
        %1118 = vmatpush.msra.mxu0 0.0
        %1119 = vmatpush.msra.mxu0 0.0
        %1120 = vmatpush.msra.mxu0 0.0
        %1121 = vmatpush.msra.mxu0 0.0
        %1122 = vmatpush.msra.mxu0 0.0
        %1123 = vmatpush.msra.mxu0 0.0
        %v1124 = vand.u32 %v1108, 4294901760
        %1125 = vmatpush.msra.mxu0 %v1124
        %v1126 = vand.u32 %v1083, 4294901760
        %1127 = vmatpush.msra.mxu0 %v1126
        %v1128 = vand.u32 %v1101, 4294901760
        %v1129 = vsub.f32 %v1101, %v1128
        %v1130 = vand.u32 %v1129, 4294901760
        %v1131 = vsub.f32 %v1129, %v1130
        %v1132 = vand.u32 %v1131, 4294901760
        %1133 = vmatmul.f32.gmra.mxu0 %v1132
        %v1134 = vpop.f32.mrf.mxu0
        %v1135 = vadd.f32 %v1092, %v1134
        %v1136 = vand.u32 %v1104, 4294901760
        %v1137 = vsub.f32 %v1104, %v1136
        %v1138 = vand.u32 %v1137, 4294901760
        %v1139 = vsub.f32 %v1137, %v1138
        %v1140 = vand.u32 %v1139, 4294901760
        %1141 = vmatmul.f32.gmra.mxu0 %v1140
        %v1142 = vpop.f32.mrf.mxu0
        %v1143 = vadd.f32 %v1097, %v1142
        %1144 = vdwg.mxu0
        %1145 = vmatpush.msra.mxu0 0.0
        %1146 = vmatpush.msra.mxu0 0.0
        %1147 = vmatpush.msra.mxu0 0.0
        %1148 = vmatpush.msra.mxu0 0.0
        %1149 = vmatpush.msra.mxu0 0.0
        %1150 = vmatpush.msra.mxu0 0.0
        %1151 = vmatpush.msra.mxu0 0.0
        %1152 = vmatpush.msra.mxu0 0.0
        %1153 = vmatpush.msra.mxu0 0.0
        %1154 = vmatpush.msra.mxu0 0.0
        %1155 = vmatpush.msra.mxu0 0.0
        %1156 = vmatpush.msra.mxu0 0.0
        %1157 = vmatpush.msra.mxu0 0.0
        %1158 = vmatpush.msra.mxu0 0.0
        %v1159 = vand.u32 %v1108, 4294901760
        %v1160 = vsub.f32 %v1108, %v1159
        %v1161 = vand.u32 %v1160, 4294901760
        %v1162 = vsub.f32 %v1160, %v1161
        %v1163 = vand.u32 %v1162, 4294901760
        %1164 = vmatpush.msra.mxu0 %v1163
        %v1165 = vand.u32 %v1083, 4294901760
        %v1166 = vsub.f32 %v1083, %v1165
        %v1167 = vand.u32 %v1166, 4294901760
        %v1168 = vsub.f32 %v1166, %v1167
        %v1169 = vand.u32 %v1168, 4294901760
        %1170 = vmatpush.msra.mxu0 %v1169
        %v1171 = vand.u32 %v1101, 4294901760
        %1172 = vmatmul.f32.gmra.mxu0 %v1171
        %v1173 = vpop.f32.mrf.mxu0
        %v1174 = vadd.f32 %v1135, %v1173
        %v1175 = vand.u32 %v1104, 4294901760
        %1176 = vmatmul.f32.gmra.mxu0 %v1175
        %v1177 = vpop.f32.mrf.mxu0
        %v1178 = vadd.f32 %v1143, %v1177
        %1179 = vdwg.mxu0
        %1180 = vmatpush.msra.mxu0 0.0
        %1181 = vmatpush.msra.mxu0 0.0
        %1182 = vmatpush.msra.mxu0 0.0
        %1183 = vmatpush.msra.mxu0 0.0
        %1184 = vmatpush.msra.mxu0 0.0
        %1185 = vmatpush.msra.mxu0 0.0
        %1186 = vmatpush.msra.mxu0 0.0
        %1187 = vmatpush.msra.mxu0 0.0
        %1188 = vmatpush.msra.mxu0 0.0
        %1189 = vmatpush.msra.mxu0 0.0
        %1190 = vmatpush.msra.mxu0 0.0
        %1191 = vmatpush.msra.mxu0 0.0
        %1192 = vmatpush.msra.mxu0 0.0
        %1193 = vmatpush.msra.mxu0 0.0
        %v1194 = vand.u32 %v1108, 4294901760
        %v1195 = vsub.f32 %v1108, %v1194
        %1196 = vmatpush.msra.mxu0 %v1195
        %v1197 = vand.u32 %v1083, 4294901760
        %v1198 = vsub.f32 %v1083, %v1197
        %1199 = vmatpush.msra.mxu0 %v1198
        %v1200 = vand.u32 %v1101, 4294901760
        %v1201 = vsub.f32 %v1101, %v1200
        %1202 = vmatmul.f32.gmra.mxu0 %v1201
        %v1203 = vpop.f32.mrf.mxu0
        %v1204 = vadd.f32 %v1174, %v1203
        %v1205 = vand.u32 %v1104, 4294901760
        %v1206 = vsub.f32 %v1104, %v1205
        %1207 = vmatmul.f32.gmra.mxu0 %v1206
        %v1208 = vpop.f32.mrf.mxu0
        %v1209 = vadd.f32 %v1178, %v1208
        %1210 = vdwg.mxu0
        %1211 = vmatpush.msra.mxu0 0.0
        %1212 = vmatpush.msra.mxu0 0.0
        %1213 = vmatpush.msra.mxu0 0.0
        %1214 = vmatpush.msra.mxu0 0.0
        %1215 = vmatpush.msra.mxu0 0.0
        %1216 = vmatpush.msra.mxu0 0.0
        %1217 = vmatpush.msra.mxu0 0.0
        %1218 = vmatpush.msra.mxu0 0.0
        %1219 = vmatpush.msra.mxu0 0.0
        %1220 = vmatpush.msra.mxu0 0.0
        %1221 = vmatpush.msra.mxu0 0.0
        %1222 = vmatpush.msra.mxu0 0.0
        %1223 = vmatpush.msra.mxu0 0.0
        %1224 = vmatpush.msra.mxu0 0.0
        %v1225 = vand.u32 %v1108, 4294901760
        %1226 = vmatpush.msra.mxu0 %v1225
        %v1227 = vand.u32 %v1083, 4294901760
        %1228 = vmatpush.msra.mxu0 %v1227
        %v1229 = vand.u32 %v1101, 4294901760
        %v1230 = vsub.f32 %v1101, %v1229
        %v1231 = vand.u32 %v1230, 4294901760
        %1232 = vmatmul.f32.gmra.mxu0 %v1231
        %v1233 = vpop.f32.mrf.mxu0
        %v1234 = vadd.f32 %v1204, %v1233
        %v1235 = vand.u32 %v1104, 4294901760
        %v1236 = vsub.f32 %v1104, %v1235
        %v1237 = vand.u32 %v1236, 4294901760
        %1238 = vmatmul.f32.gmra.mxu0 %v1237
        %v1239 = vpop.f32.mrf.mxu0
        %v1240 = vadd.f32 %v1209, %v1239
        %1241 = vdwg.mxu0
        %1242 = vmatpush.msra.mxu0 0.0
        %1243 = vmatpush.msra.mxu0 0.0
        %1244 = vmatpush.msra.mxu0 0.0
        %1245 = vmatpush.msra.mxu0 0.0
        %1246 = vmatpush.msra.mxu0 0.0
        %1247 = vmatpush.msra.mxu0 0.0
        %1248 = vmatpush.msra.mxu0 0.0
        %1249 = vmatpush.msra.mxu0 0.0
        %1250 = vmatpush.msra.mxu0 0.0
        %1251 = vmatpush.msra.mxu0 0.0
        %1252 = vmatpush.msra.mxu0 0.0
        %1253 = vmatpush.msra.mxu0 0.0
        %1254 = vmatpush.msra.mxu0 0.0
        %1255 = vmatpush.msra.mxu0 0.0
        %v1256 = vand.u32 %v1108, 4294901760
        %v1257 = vsub.f32 %v1108, %v1256
        %v1258 = vand.u32 %v1257, 4294901760
        %1259 = vmatpush.msra.mxu0 %v1258
        %v1260 = vand.u32 %v1083, 4294901760
        %v1261 = vsub.f32 %v1083, %v1260
        %v1262 = vand.u32 %v1261, 4294901760
        %1263 = vmatpush.msra.mxu0 %v1262
        %v1264 = vand.u32 %v1101, 4294901760
        %1265 = vmatmul.f32.gmra.mxu0 %v1264
        %v1266 = vpop.f32.mrf.mxu0
        %v1267 = vadd.f32 %v1234, %v1266
        %v1268 = vand.u32 %v1104, 4294901760
        %1269 = vmatmul.f32.gmra.mxu0 %v1268
        %v1270 = vpop.f32.mrf.mxu0
        %v1271 = vadd.f32 %v1240, %v1270
        %1272 = vdwg.mxu0
        %1273 = vmatpush.msra.mxu0 0.0
        %1274 = vmatpush.msra.mxu0 0.0
        %1275 = vmatpush.msra.mxu0 0.0
        %1276 = vmatpush.msra.mxu0 0.0
        %1277 = vmatpush.msra.mxu0 0.0
        %1278 = vmatpush.msra.mxu0 0.0
        %1279 = vmatpush.msra.mxu0 0.0
        %1280 = vmatpush.msra.mxu0 0.0
        %1281 = vmatpush.msra.mxu0 0.0
        %1282 = vmatpush.msra.mxu0 0.0
        %1283 = vmatpush.msra.mxu0 0.0
        %1284 = vmatpush.msra.mxu0 0.0
        %1285 = vmatpush.msra.mxu0 0.0
        %1286 = vmatpush.msra.mxu0 0.0
        %v1287 = vand.u32 %v1108, 4294901760
        %1288 = vmatpush.msra.mxu0 %v1287
        %v1289 = vand.u32 %v1083, 4294901760
        %1290 = vmatpush.msra.mxu0 %v1289
        %v1291 = vand.u32 %v1101, 4294901760
        %1292 = vmatmul.f32.gmra.mxu0 %v1291
        %v1293 = vpop.f32.mrf.mxu0
        %v1294 = vadd.f32 %v1267, %v1293
        %v1295 = vand.u32 %v1104, 4294901760
        %1296 = vmatmul.f32.gmra.mxu0 %v1295
        %v1297 = vpop.f32.mrf.mxu0
        %v1298 = vadd.f32 %v1271, %v1297
        %1299 = vdwg.mxu0
        %vm1300 = vcmp.ge.f32.partialorder %v1294, 0.0
        %vm1301 = vcmp.ge.f32.partialorder %v1298, 0.0
        %v1302 = vmul.f32 %v1294, 0.2
        %v1303 = vmul.f32 %v1298, 0.2
        %v1304 = vsel %vm1300, %v1294, %v1302
        %v1305 = vsel %vm1301, %v1298, %v1303
        %v1306 = vld [vmem:[%s9] sm:$0x1f]
        %v1307 = vld [vmem:[%s10] sm:$0x1f]
        %1309 = vset.pattern.permute.xlu0 0
        %1310 = vperm.xlu0 %1309, %v1307
        %v1311 = vpop.permute.xlu0 %1310
        %vm1313 = vcmask 72704
        %v1315 = vsel %vm1313, %v1306, 0
        %v1318 = vsel %vm430, %v1305, 0
        %1320 = vmatpush.msra.mxu0 0.0
        %1321 = vmatpush.msra.mxu0 0.0
        %1322 = vmatpush.msra.mxu0 0.0
        %1323 = vmatpush.msra.mxu0 0.0
        %1324 = vmatpush.msra.mxu0 0.0
        %1325 = vmatpush.msra.mxu0 0.0
        %1326 = vmatpush.msra.mxu0 0.0
        %1327 = vmatpush.msra.mxu0 0.0
        %1328 = vmatpush.msra.mxu0 0.0
        %1329 = vmatpush.msra.mxu0 0.0
        %1330 = vmatpush.msra.mxu0 0.0
        %1331 = vmatpush.msra.mxu0 0.0
        %1332 = vmatpush.msra.mxu0 0.0
        %1333 = vmatpush.msra.mxu0 0.0
        %v1334 = vand.u32 %v1318, 4294901760
        %1335 = vmatpush.msra.mxu0 %v1334
        %v1336 = vand.u32 %v1304, 4294901760
        %1337 = vmatpush.msra.mxu0 %v1336
        %v1338 = vand.u32 %v1315, 4294901760
        %v1339 = vsub.f32 %v1315, %v1338
        %v1340 = vand.u32 %v1339, 4294901760
        %v1341 = vsub.f32 %v1339, %v1340
        %v1342 = vand.u32 %v1341, 4294901760
        %1343 = vmatmul.f32.gmra.mxu0 %v1342
        %v1344 = vpop.f32.mrf.mxu0
        %v1345 = vadd.f32 %v1311, %v1344
        %1346 = vdwg.mxu0
        %1347 = vmatpush.msra.mxu0 0.0
        %1348 = vmatpush.msra.mxu0 0.0
        %1349 = vmatpush.msra.mxu0 0.0
        %1350 = vmatpush.msra.mxu0 0.0
        %1351 = vmatpush.msra.mxu0 0.0
        %1352 = vmatpush.msra.mxu0 0.0
        %1353 = vmatpush.msra.mxu0 0.0
        %1354 = vmatpush.msra.mxu0 0.0
        %1355 = vmatpush.msra.mxu0 0.0
        %1356 = vmatpush.msra.mxu0 0.0
        %1357 = vmatpush.msra.mxu0 0.0
        %1358 = vmatpush.msra.mxu0 0.0
        %1359 = vmatpush.msra.mxu0 0.0
        %1360 = vmatpush.msra.mxu0 0.0
        %v1361 = vand.u32 %v1318, 4294901760
        %v1362 = vsub.f32 %v1318, %v1361
        %v1363 = vand.u32 %v1362, 4294901760
        %v1364 = vsub.f32 %v1362, %v1363
        %v1365 = vand.u32 %v1364, 4294901760
        %1366 = vmatpush.msra.mxu0 %v1365
        %v1367 = vand.u32 %v1304, 4294901760
        %v1368 = vsub.f32 %v1304, %v1367
        %v1369 = vand.u32 %v1368, 4294901760
        %v1370 = vsub.f32 %v1368, %v1369
        %v1371 = vand.u32 %v1370, 4294901760
        %1372 = vmatpush.msra.mxu0 %v1371
        %v1373 = vand.u32 %v1315, 4294901760
        %1374 = vmatmul.f32.gmra.mxu0 %v1373
        %v1375 = vpop.f32.mrf.mxu0
        %v1376 = vadd.f32 %v1345, %v1375
        %1377 = vdwg.mxu0
        %1378 = vmatpush.msra.mxu0 0.0
        %1379 = vmatpush.msra.mxu0 0.0
        %1380 = vmatpush.msra.mxu0 0.0
        %1381 = vmatpush.msra.mxu0 0.0
        %1382 = vmatpush.msra.mxu0 0.0
        %1383 = vmatpush.msra.mxu0 0.0
        %1384 = vmatpush.msra.mxu0 0.0
        %1385 = vmatpush.msra.mxu0 0.0
        %1386 = vmatpush.msra.mxu0 0.0
        %1387 = vmatpush.msra.mxu0 0.0
        %1388 = vmatpush.msra.mxu0 0.0
        %1389 = vmatpush.msra.mxu0 0.0
        %1390 = vmatpush.msra.mxu0 0.0
        %1391 = vmatpush.msra.mxu0 0.0
        %v1392 = vand.u32 %v1318, 4294901760
        %v1393 = vsub.f32 %v1318, %v1392
        %1394 = vmatpush.msra.mxu0 %v1393
        %v1395 = vand.u32 %v1304, 4294901760
        %v1396 = vsub.f32 %v1304, %v1395
        %1397 = vmatpush.msra.mxu0 %v1396
        %v1398 = vand.u32 %v1315, 4294901760
        %v1399 = vsub.f32 %v1315, %v1398
        %1400 = vmatmul.f32.gmra.mxu0 %v1399
        %v1401 = vpop.f32.mrf.mxu0
        %v1402 = vadd.f32 %v1376, %v1401
        %1403 = vdwg.mxu0
        %1404 = vmatpush.msra.mxu0 0.0
        %1405 = vmatpush.msra.mxu0 0.0
        %1406 = vmatpush.msra.mxu0 0.0
        %1407 = vmatpush.msra.mxu0 0.0
        %1408 = vmatpush.msra.mxu0 0.0
        %1409 = vmatpush.msra.mxu0 0.0
        %1410 = vmatpush.msra.mxu0 0.0
        %1411 = vmatpush.msra.mxu0 0.0
        %1412 = vmatpush.msra.mxu0 0.0
        %1413 = vmatpush.msra.mxu0 0.0
        %1414 = vmatpush.msra.mxu0 0.0
        %1415 = vmatpush.msra.mxu0 0.0
        %1416 = vmatpush.msra.mxu0 0.0
        %1417 = vmatpush.msra.mxu0 0.0
        %v1418 = vand.u32 %v1318, 4294901760
        %1419 = vmatpush.msra.mxu0 %v1418
        %v1420 = vand.u32 %v1304, 4294901760
        %1421 = vmatpush.msra.mxu0 %v1420
        %v1422 = vand.u32 %v1315, 4294901760
        %v1423 = vsub.f32 %v1315, %v1422
        %v1424 = vand.u32 %v1423, 4294901760
        %1425 = vmatmul.f32.gmra.mxu0 %v1424
        %v1426 = vpop.f32.mrf.mxu0
        %v1427 = vadd.f32 %v1402, %v1426
        %1428 = vdwg.mxu0
        %1429 = vmatpush.msra.mxu0 0.0
        %1430 = vmatpush.msra.mxu0 0.0
        %1431 = vmatpush.msra.mxu0 0.0
        %1432 = vmatpush.msra.mxu0 0.0
        %1433 = vmatpush.msra.mxu0 0.0
        %1434 = vmatpush.msra.mxu0 0.0
        %1435 = vmatpush.msra.mxu0 0.0
        %1436 = vmatpush.msra.mxu0 0.0
        %1437 = vmatpush.msra.mxu0 0.0
        %1438 = vmatpush.msra.mxu0 0.0
        %1439 = vmatpush.msra.mxu0 0.0
        %1440 = vmatpush.msra.mxu0 0.0
        %1441 = vmatpush.msra.mxu0 0.0
        %1442 = vmatpush.msra.mxu0 0.0
        %v1443 = vand.u32 %v1318, 4294901760
        %v1444 = vsub.f32 %v1318, %v1443
        %v1445 = vand.u32 %v1444, 4294901760
        %1446 = vmatpush.msra.mxu0 %v1445
        %v1447 = vand.u32 %v1304, 4294901760
        %v1448 = vsub.f32 %v1304, %v1447
        %v1449 = vand.u32 %v1448, 4294901760
        %1450 = vmatpush.msra.mxu0 %v1449
        %v1451 = vand.u32 %v1315, 4294901760
        %1452 = vmatmul.f32.gmra.mxu0 %v1451
        %v1453 = vpop.f32.mrf.mxu0
        %v1454 = vadd.f32 %v1427, %v1453
        %1455 = vdwg.mxu0
        %1456 = vmatpush.msra.mxu0 0.0
        %1457 = vmatpush.msra.mxu0 0.0
        %1458 = vmatpush.msra.mxu0 0.0
        %1459 = vmatpush.msra.mxu0 0.0
        %1460 = vmatpush.msra.mxu0 0.0
        %1461 = vmatpush.msra.mxu0 0.0
        %1462 = vmatpush.msra.mxu0 0.0
        %1463 = vmatpush.msra.mxu0 0.0
        %1464 = vmatpush.msra.mxu0 0.0
        %1465 = vmatpush.msra.mxu0 0.0
        %1466 = vmatpush.msra.mxu0 0.0
        %1467 = vmatpush.msra.mxu0 0.0
        %1468 = vmatpush.msra.mxu0 0.0
        %1469 = vmatpush.msra.mxu0 0.0
        %v1470 = vand.u32 %v1318, 4294901760
        %1471 = vmatpush.msra.mxu0 %v1470
        %v1472 = vand.u32 %v1304, 4294901760
        %1473 = vmatpush.msra.mxu0 %v1472
        %v1474 = vand.u32 %v1315, 4294901760
        %1475 = vmatmul.f32.gmra.mxu0 %v1474
        %v1476 = vpop.f32.mrf.mxu0
        %v1477 = vadd.f32 %v1454, %v1476
        %1478 = vdwg.mxu0
        %1479 = vst [vmem:[%s405] sm:$0x1f] %v1477
        %s1480 = sand.u32 %s272, 1
        %s1481 = scalar_lea.sflag [#allocation4], %s1480
        %s1482 = sand.u32 %s272, 1
        %s1483 = smul.addr %s1482, 8
        %s1484 = scalar_lea.vmem [#allocation5], %s1483
        // Predicated region
        $region69: #{dfnn_forward.1} parent=63 // pred_check
          %p1485 = pneg %p282
        $region70: #{dfnn_forward.1} parent=63 // pred_check_branch
          %1487 = sbr.rel (%p1485) target = $region72
        $region71: #{dfnn_forward.1} parent=63 // pred_region
          %1489 = vsyncadd %s1481, 0
          %s1490 = smul.addr %s28, 8
          %s1491 = scalar_lea.hbm %s11, %s1490
          %s1493 = sshll.u32 %s1484, 4
          %s1494 = int_to_ptr.vmem [resolvable:$true] %s1493
          %s1495 = sshll.u32 %s1491, 4
          %s1496 = int_to_ptr.hbm [resolvable:$true] %s1495
          %1498 = dma.vmem_to_hbm [thread:$0]  %s1494, 128, %s1496, %s1481
        $region72: #{dfnn_forward.1} parent=63 // pred_fallthru
          _
      $region64: #{dfnn_forward.1} parent=5 // pred_fallthru
        _
      %p1499 = scmp.le.s32.totalorder 2, %s23
      // Predicated region
      $region73: #{dfnn_forward.1} parent=5 // pred_check
        %p1500 = pneg %p1499
      $region74: #{dfnn_forward.1} parent=5 // pred_check_branch
        %1502 = sbr.rel (%p1500) target = $region76
      $region75: #{dfnn_forward.1} parent=5 // pred_region
        %s1503 = ssub.s32 %s23, 2
        // Predicated region
        $region77: #{dfnn_forward.1} parent=75 // pred_check
          %p1504 = pneg %p288
        $region78: #{dfnn_forward.1} parent=75 // pred_check_branch
          %1506 = sbr.rel (%p1504) target = $region80
        $region79: #{dfnn_forward.1} parent=75 // pred_region
          %s1507 = sand.u32 %s273, 1
          %s1508 = scalar_lea.sflag [#allocation4], %s1507
          %s1509 = sand.u32 %s273, 1
          %s1510 = smul.addr %s1509, 8
          %s1511 = scalar_lea.vmem [#allocation5], %s1510
          %1513 = dma.done %s1508, 128
        $region80: #{dfnn_forward.1} parent=75 // pred_fallthru
          _
      $region76: #{dfnn_forward.1} parent=5 // pred_fallthru
        _
    $region6: #{dfnn_forward.1} parent=1 // loop_footer
      %s27 = sadd.s32 1, %s23
    $region7: #{dfnn_forward.1} parent=1 // loop_footer_branch
      %22 = sbr.rel target = $region3
    $region8: #{dfnn_forward.1} parent=1 // loop_exit
      _
    %1514 = vsyncpa [#allocation3], 1
    %s1515 = scalar_lea.sflag [#allocation3], 1
    %1516 = vsyncpa %s1515, 1
    %1517 = vsyncpa [#allocation4], 1
    %s1518 = scalar_lea.sflag [#allocation4], 1
    %1519 = vsyncpa %s1518, 1

</llo_original>
